<compile_context>
chip_gen: v7x
topology: tpu7x:2x2x1
jax: 0.10.0
libtpu: 0.0.40
codegen_flags: <defaults>
</compile_context>

<pallas_src>
import jax
import jax.numpy as jnp
from jax.experimental import pallas as pl
from jax.experimental.pallas import tpu as pltpu


def _attn_decoder_kernel(
    emb_ref,        # (Bp, E)      embedded tokens (dropout == identity, eval)
    hid_ref,        # (Bp, H)      hidden.squeeze(0)
    enc_ref,        # (Bp, L, A)   encoder_outputs
    attn_we_ref,    # (E, A)       attn weight, embedded half (pre-transposed)
    attn_wh_ref,    # (H, A)       attn weight, hidden half (pre-transposed)
    comb_we_ref,    # (E, H)       attn_combine weight, embedded half
    comb_wa_ref,    # (L, H)       attn_combine weight, attn_applied half
    w_ih_ref,       # (3, H, H)    GRU input->hidden, per gate (r, z, n)
    w_hh_ref,       # (3, H, H)    GRU hidden->hidden, per gate (r, z, n)
    out_w_ref,      # (H, O)       output projection (pre-transposed)
    bias_ref,       # (9, 128)     packed biases, see pack_params()
    logp_ref,       # (Bp, O)      log_softmax output
    new_hid_ref,    # (Bp, H)      new GRU hidden (HBM-aliased with hid input)
    attn_w_out_ref, # (Bp, A)      attention weights
):
    emb = emb_ref[...]
    hid = hid_ref[...]

    H = hid_ref.shape[1]
    A = attn_w_out_ref.shape[1]
    O = logp_ref.shape[1]

    attn_b = bias_ref[0:1, 0:A]
    comb_b = bias_ref[1:2, 0:H]
    out_b = bias_ref[2:3, 0:O]
    b_ih_r = bias_ref[3:4, 0:H]
    b_ih_z = bias_ref[4:5, 0:H]
    b_ih_n = bias_ref[5:6, 0:H]
    b_hh_r = bias_ref[6:7, 0:H]
    b_hh_z = bias_ref[7:8, 0:H]
    b_hh_n = bias_ref[8:9, 0:H]

    # --- attention weights: softmax(attn(cat(emb, hid)), dim=1) -------------
    # cat + one matmul is replaced by two partial matmuls on the host-side
    # split weight (no lane-axis concatenation inside the kernel).
    attn_logits = (
        jnp.dot(emb, attn_we_ref[...], preferred_element_type=jnp.float32)
        + jnp.dot(hid, attn_wh_ref[...], preferred_element_type=jnp.float32)
        + attn_b
    )                                                              # (Bp, A)
    m = jnp.max(attn_logits, axis=1, keepdims=True)
    e = jnp.exp(attn_logits - m)
    denom = jnp.sum(e, axis=1, keepdims=True)
    aw = e * pl.reciprocal(denom, approx=True)                     # (Bp, A)
    attn_w_out_ref[...] = aw

    # --- attn_applied = bmm(encoder_outputs, aw^T)[:, :, 0] -> (Bp, L) ------
    attn_applied = jnp.sum(enc_ref[...] * aw[:, None, :], axis=-1)

    # --- attn_combine + relu (split weights, no concat) ---------------------
    x = (
        jnp.dot(emb, comb_we_ref[...], preferred_element_type=jnp.float32)
        + jnp.dot(attn_applied, comb_wa_ref[...],
                  preferred_element_type=jnp.float32)
        + comb_b
    )                                                              # (Bp, H)
    x = jnp.maximum(x, 0.0)

    # --- single-step GRU cell, PyTorch gate order (r, z, n) -----------------
    # Per-gate weight stacks avoid lane-offset slicing of a (Bp, 3H) result.
    i_r = jnp.dot(x, w_ih_ref[0], preferred_element_type=jnp.float32) + b_ih_r
    i_z = jnp.dot(x, w_ih_ref[1], preferred_element_type=jnp.float32) + b_ih_z
    i_n = jnp.dot(x, w_ih_ref[2], preferred_element_type=jnp.float32) + b_ih_n
    h_r = jnp.dot(hid, w_hh_ref[0], preferred_element_type=jnp.float32) + b_hh_r
    h_z = jnp.dot(hid, w_hh_ref[1], preferred_element_type=jnp.float32) + b_hh_z
    h_n = jnp.dot(hid, w_hh_ref[2], preferred_element_type=jnp.float32) + b_hh_n
    r = jax.nn.sigmoid(i_r + h_r)
    z = jax.nn.sigmoid(i_z + h_z)
    n = jnp.tanh(i_n + r * h_n)
    h_new = (1.0 - z) * n + z * hid                                # (Bp, H)
    new_hid_ref[...] = h_new

    # --- output projection + (exact) log_softmax ----------------------------
    logits = (
        jnp.dot(h_new, out_w_ref[...], preferred_element_type=jnp.float32)
        + out_b
    )                                                              # (Bp, O)
    lm = jnp.max(logits, axis=1, keepdims=True)
    lse = jnp.log(jnp.sum(jnp.exp(logits - lm), axis=1, keepdims=True)) + lm
    logp_ref[...] = logits - lse


@jax.jit
def attn_decoder_forward(input_ids, hidden, encoder_outputs, params):
    """Mirrors AttnDecoderRNN.forward (eval mode, batched input).

    input_ids:        (B,) int32 token indices
    hidden:           (1, B, H) float32
    encoder_outputs:  (B, max_length+1, 10) float32
    Returns (log_probs (B, O), hidden (1, B, H), attn_weights (B, 10)).
    """
    # Glue: embedding lookup (dropout == identity in eval) and hidden squeeze.
    embedded = jnp.take(params["embedding"], input_ids, axis=0)    # (B, E)
    hid2d = hidden[0]                                              # (B, H)

    B = embedded.shape[0]
    H = hid2d.shape[1]
    A = encoder_outputs.shape[2]
    O = params["out_w"].shape[1]

    # Pad batch to a full f32 sublane group (8) so every (B, .) tile is a
    # full-height 8x128 tile; padded rows are sliced off after the call.
    Bp = max(8, -(-B // 8) * 8)
    pad = Bp - B
    emb_p = jnp.pad(embedded, ((0, pad), (0, 0)))
    hid_p = jnp.pad(hid2d, ((0, pad), (0, 0)))
    enc_p = jnp.pad(encoder_outputs, ((0, pad), (0, 0), (0, 0)))

    vmem = pl.BlockSpec(memory_space=pltpu.MemorySpace.VMEM)

    logp, new_hid, attn_w = pl.pallas_call(
        _attn_decoder_kernel,
        out_shape=(
            jax.ShapeDtypeStruct((Bp, O), jnp.float32),
            jax.ShapeDtypeStruct((Bp, H), jnp.float32),
            jax.ShapeDtypeStruct((Bp, A), jnp.float32),
        ),
        in_specs=[vmem] * 11,
        out_specs=(vmem, vmem, vmem),
        # Hidden state reuses its input HBM buffer (no extra round trip).
        input_output_aliases={1: 1},
    )(
        emb_p,
        hid_p,
        enc_p,
        params["attn_w_e"],
        params["attn_w_h"],
        params["comb_w_e"],
        params["comb_w_a"],
        params["gru_w_ih"],
        params["gru_w_hh"],
        params["out_w"],
        params["bias"],
    )
    return logp[:B], new_hid[None, :B, :], attn_w[:B]


def make_torch_style_params(key, vocab_size, embedding_size, output_size,
                            max_length):
    """Deterministic synthetic params in PyTorch (out_features, in_features) layout."""
    E = H = embedding_size
    L = max_length + 1
    A = 10
    ks = jax.random.split(key, 11)
    s = 0.1

    def w(k, shape):
        return (s * jax.random.normal(k, shape)).astype(jnp.float32)

    return {
        "embedding": w(ks[0], (vocab_size, E)),
        "attn_weight": w(ks[1], (A, 2 * E)),
        "attn_bias": w(ks[2], (A,)),
        "comb_weight": w(ks[3], (H, H + L)),
        "comb_bias": w(ks[4], (H,)),
        "gru_w_ih": w(ks[5], (3 * H, H)),   # gates stacked r, z, n (PyTorch order)
        "gru_w_hh": w(ks[6], (3 * H, H)),
        "gru_b_ih": w(ks[7], (3 * H,)),
        "gru_b_hh": w(ks[8], (3 * H,)),
        "out_weight": w(ks[9], (output_size, H)),
        "out_bias": w(ks[10], (output_size,)),
    }


def pack_params(p):
    """Convert PyTorch-layout params into the fused-kernel layout."""
    A, two_e = p["attn_weight"].shape
    E = two_e // 2
    H = p["comb_weight"].shape[0]
    O = p["out_weight"].shape[0]
    assert max(A, H, O) <= 128, "packed-bias slab assumes feature dims <= 128"

    def split_gates(w):  # torch (3H, K) with rows [r|z|n] -> (3, K, H) pre-transposed
        return jnp.stack([w[g * H:(g + 1) * H, :].T for g in range(3)], axis=0)

    bias = jnp.zeros((9, 128), jnp.float32)
    bias = bias.at[0, :A].set(p["attn_bias"])
    bias = bias.at[1, :H].set(p["comb_bias"])
    bias = bias.at[2, :O].set(p["out_bias"])
    for g in range(3):
        bias = bias.at[3 + g, :H].set(p["gru_b_ih"][g * H:(g + 1) * H])
        bias = bias.at[6 + g, :H].set(p["gru_b_hh"][g * H:(g + 1) * H])

    return {
        "embedding": p["embedding"],
        "attn_w_e": p["attn_weight"][:, :E].T,        # (E, A)
        "attn_w_h": p["attn_weight"][:, E:].T,        # (H, A)
        "comb_w_e": p["comb_weight"][:, :E].T,        # (E, H)
        "comb_w_a": p["comb_weight"][:, E:].T,        # (L, H)
        "gru_w_ih": split_gates(p["gru_w_ih"]),       # (3, H, H)
        "gru_w_hh": split_gates(p["gru_w_hh"]),       # (3, H, H)
        "out_w": p["out_weight"].T,                   # (H, O)
        "bias": bias,                                 # (9, 128) packed biases
    }


def reference_forward(input_ids, hidden, encoder_outputs, p):
    """Pure-JAX mirror of the PyTorch forward (eval mode), for validation."""
    emb = jnp.take(p["embedding"], input_ids, axis=0)
    hid = hidden[0]
    H = hid.shape[1]
    attn_logits = (jnp.concatenate([emb, hid], axis=1) @ p["attn_weight"].T
                   + p["attn_bias"])
    aw = jax.nn.softmax(attn_logits, axis=1)
    attn_applied = jnp.einsum("bla,ba->bl", encoder_outputs, aw)
    x = (jnp.concatenate([emb, attn_applied], axis=1) @ p["comb_weight"].T
         + p["comb_bias"])
    x = jnp.maximum(x, 0.0)
    gi = x @ p["gru_w_ih"].T + p["gru_b_ih"]
    gh = hid @ p["gru_w_hh"].T + p["gru_b_hh"]
    i_r, i_z, i_n = gi[:, :H], gi[:, H:2 * H], gi[:, 2 * H:]
    h_r, h_z, h_n = gh[:, :H], gh[:, H:2 * H], gh[:, 2 * H:]
    r = jax.nn.sigmoid(i_r + h_r)
    z = jax.nn.sigmoid(i_z + h_z)
    n = jnp.tanh(i_n + r * h_n)
    h_new = (1.0 - z) * n + z * hid
    logits = h_new @ p["out_weight"].T + p["out_bias"]
    return jax.nn.log_softmax(logits, axis=1), h_new[None], aw


if __name__ == "__main__":
    key = jax.random.PRNGKey(0)
    k_par, k_ids, k_hid, k_enc = jax.random.split(key, 4)

    # Small shapes consistent with the module's forward.
    VOCAB = 30          # input_size
    E = 32              # embedding_size == hidden_size
    OUT = 16            # output_size
    MAX_LEN = 20        # max_length -> encoder_outputs has MAX_LEN + 1 = 21 steps
    B = 4               # batch
    L = MAX_LEN + 1
    A = 10              # attn Linear out_features (hard-coded in the module)

    torch_params = make_torch_style_params(k_par, VOCAB, E, OUT, MAX_LEN)
    params = pack_params(torch_params)

    input_ids = jax.random.randint(k_ids, (B,), 0, VOCAB, dtype=jnp.int32)
    hidden = (0.1 * jax.random.normal(k_hid, (1, B, E))).astype(jnp.float32)
    encoder_outputs = (0.1 * jax.random.normal(k_enc, (B, L, A))).astype(jnp.float32)

    logp, new_hidden, attn_weights = attn_decoder_forward(
        input_ids, hidden, encoder_outputs, params)
    jax.block_until_ready((logp, new_hidden, attn_weights))

    assert logp.shape == (B, OUT)
    assert new_hidden.shape == (1, B, E)
    assert attn_weights.shape == (B, A)

    # Numerical check against a pure-JAX mirror of the PyTorch forward.
    ref_logp, ref_hid, ref_aw = reference_forward(
        input_ids, hidden, encoder_outputs, torch_params)
    ok = (jnp.allclose(logp, ref_logp, atol=2e-2, rtol=2e-2)
          and jnp.allclose(new_hidden, ref_hid, atol=2e-2, rtol=2e-2)
          and jnp.allclose(attn_weights, ref_aw, atol=2e-2, rtol=2e-2))
    assert bool(ok), "kernel output does not match pure-JAX reference"
    print("KERNEL_OK")
</pallas_src>

<mosaic_0001>
module attributes {stable_mosaic.version = 11 : i64} {
  func.func @_attn_decoder_kernel(%arg0: memref<8x32xf32, #tpu.memory_space<vmem>>, %arg1: memref<8x32xf32, #tpu.memory_space<vmem>>, %arg2: memref<8x21x10xf32, #tpu.memory_space<vmem>>, %arg3: memref<32x10xf32, #tpu.memory_space<vmem>>, %arg4: memref<32x10xf32, #tpu.memory_space<vmem>>, %arg5: memref<32x32xf32, #tpu.memory_space<vmem>>, %arg6: memref<21x32xf32, #tpu.memory_space<vmem>>, %arg7: memref<3x32x32xf32, #tpu.memory_space<vmem>>, %arg8: memref<3x32x32xf32, #tpu.memory_space<vmem>>, %arg9: memref<32x16xf32, #tpu.memory_space<vmem>>, %arg10: memref<9x128xf32, #tpu.memory_space<vmem>>, %arg11: memref<8x16xf32, #tpu.memory_space<vmem>>, %arg12: memref<8x32xf32, #tpu.memory_space<vmem>>, %arg13: memref<8x10xf32, #tpu.memory_space<vmem>>) attributes {dimension_semantics = [], scalar_prefetch = 0 : i64, scratch_operands = 0 : i64, tpu.core_type = #tpu.core_type<tc>} {
    %c0 = arith.constant 0 : index
    %c0_0 = arith.constant 0 : index
    %0 = vector.load %arg0[%c0, %c0_0] : memref<8x32xf32, #tpu.memory_space<vmem>>, vector<8x32xf32>
    %c0_1 = arith.constant 0 : index
    %c0_2 = arith.constant 0 : index
    %1 = vector.load %arg1[%c0_1, %c0_2] : memref<8x32xf32, #tpu.memory_space<vmem>>, vector<8x32xf32>
    %c0_3 = arith.constant 0 : index
    %c0_4 = arith.constant 0 : index
    %2 = vector.load %arg10[%c0_3, %c0_4] : memref<9x128xf32, #tpu.memory_space<vmem>>, vector<1x10xf32>
    %c1 = arith.constant 1 : index
    %c0_5 = arith.constant 0 : index
    %3 = vector.load %arg10[%c1, %c0_5] : memref<9x128xf32, #tpu.memory_space<vmem>>, vector<1x32xf32>
    %c2 = arith.constant 2 : index
    %c0_6 = arith.constant 0 : index
    %4 = vector.load %arg10[%c2, %c0_6] : memref<9x128xf32, #tpu.memory_space<vmem>>, vector<1x16xf32>
    %c3 = arith.constant 3 : index
    %c0_7 = arith.constant 0 : index
    %5 = vector.load %arg10[%c3, %c0_7] : memref<9x128xf32, #tpu.memory_space<vmem>>, vector<1x32xf32>
    %c4 = arith.constant 4 : index
    %c0_8 = arith.constant 0 : index
    %6 = vector.load %arg10[%c4, %c0_8] : memref<9x128xf32, #tpu.memory_space<vmem>>, vector<1x32xf32>
    %c5 = arith.constant 5 : index
    %c0_9 = arith.constant 0 : index
    %7 = vector.load %arg10[%c5, %c0_9] : memref<9x128xf32, #tpu.memory_space<vmem>>, vector<1x32xf32>
    %c6 = arith.constant 6 : index
    %c0_10 = arith.constant 0 : index
    %8 = vector.load %arg10[%c6, %c0_10] : memref<9x128xf32, #tpu.memory_space<vmem>>, vector<1x32xf32>
    %c7 = arith.constant 7 : index
    %c0_11 = arith.constant 0 : index
    %9 = vector.load %arg10[%c7, %c0_11] : memref<9x128xf32, #tpu.memory_space<vmem>>, vector<1x32xf32>
    %c8 = arith.constant 8 : index
    %c0_12 = arith.constant 0 : index
    %10 = vector.load %arg10[%c8, %c0_12] : memref<9x128xf32, #tpu.memory_space<vmem>>, vector<1x32xf32>
    %c0_13 = arith.constant 0 : index
    %c0_14 = arith.constant 0 : index
    %11 = vector.load %arg3[%c0_13, %c0_14] : memref<32x10xf32, #tpu.memory_space<vmem>>, vector<32x10xf32>
    %cst = arith.constant dense<0.000000e+00> : vector<8x10xf32>
    %12 = tpu.matmul %0, %11, %cst {dimension_numbers = #tpu.dot_dimension_numbers<[1], [0], [0], [1], [0, 0, 1, 1], [], []>} : vector<8x32xf32>, vector<32x10xf32>, vector<8x10xf32> -> vector<8x10xf32>
    %c0_15 = arith.constant 0 : index
    %c0_16 = arith.constant 0 : index
    %13 = vector.load %arg4[%c0_15, %c0_16] : memref<32x10xf32, #tpu.memory_space<vmem>>, vector<32x10xf32>
    %cst_17 = arith.constant dense<0.000000e+00> : vector<8x10xf32>
    %14 = tpu.matmul %1, %13, %cst_17 {dimension_numbers = #tpu.dot_dimension_numbers<[1], [0], [0], [1], [0, 0, 1, 1], [], []>} : vector<8x32xf32>, vector<32x10xf32>, vector<8x10xf32> -> vector<8x10xf32>
    %15 = arith.addf %12, %14 : vector<8x10xf32>
    %16 = vector.broadcast %2 : vector<1x10xf32> to vector<8x10xf32>
    %17 = arith.addf %15, %16 : vector<8x10xf32>
    %cst_18 = arith.constant dense<0xFF800000> : vector<8xf32>
    %18 = vector.multi_reduction <maximumf>, %17, %cst_18 [1] : vector<8x10xf32> to vector<8xf32>
    %19 = vector.shape_cast %18 : vector<8xf32> to vector<8x1xf32>
    %20 = vector.broadcast %19 : vector<8x1xf32> to vector<8x10xf32>
    %21 = arith.subf %17, %20 : vector<8x10xf32>
    %22 = math.exp %21 : vector<8x10xf32>
    %cst_19 = arith.constant dense<0.000000e+00> : vector<8xf32>
    %23 = vector.multi_reduction <add>, %22, %cst_19 [1] : vector<8x10xf32> to vector<8xf32>
    %24 = vector.shape_cast %23 : vector<8xf32> to vector<8x1xf32>
    %25 = tpu.reciprocal %24 {approx = true} : vector<8x1xf32> -> vector<8x1xf32>
    %26 = vector.broadcast %25 : vector<8x1xf32> to vector<8x10xf32>
    %27 = arith.mulf %22, %26 : vector<8x10xf32>
    %c0_20 = arith.constant 0 : index
    %c0_21 = arith.constant 0 : index
    %28 = vector.load %arg13[%c0_20, %c0_21] : memref<8x10xf32, #tpu.memory_space<vmem>>, vector<8x10xf32>
    tpu.vector_store %arg13[%c0_20, %c0_21], %27 {strides = array<i32>} : memref<8x10xf32, #tpu.memory_space<vmem>>, vector<8x10xf32>,
    %c0_22 = arith.constant 0 : index
    %c0_23 = arith.constant 0 : index
    %c0_24 = arith.constant 0 : index
    %29 = vector.load %arg2[%c0_22, %c0_23, %c0_24] : memref<8x21x10xf32, #tpu.memory_space<vmem>>, vector<8x21x10xf32>
    %30 = vector.shape_cast %27 : vector<8x10xf32> to vector<8x1x10xf32>
    %31 = vector.broadcast %30 : vector<8x1x10xf32> to vector<8x21x10xf32>
    %32 = arith.mulf %29, %31 : vector<8x21x10xf32>
    %cst_25 = arith.constant dense<0.000000e+00> : vector<8x21xf32>
    %33 = vector.multi_reduction <add>, %32, %cst_25 [2] : vector<8x21x10xf32> to vector<8x21xf32>
    %c0_26 = arith.constant 0 : index
    %c0_27 = arith.constant 0 : index
    %34 = vector.load %arg5[%c0_26, %c0_27] : memref<32x32xf32, #tpu.memory_space<vmem>>, vector<32x32xf32>
    %cst_28 = arith.constant dense<0.000000e+00> : vector<8x32xf32>
    %35 = tpu.matmul %0, %34, %cst_28 {dimension_numbers = #tpu.dot_dimension_numbers<[1], [0], [0], [1], [0, 0, 1, 1], [], []>} : vector<8x32xf32>, vector<32x32xf32>, vector<8x32xf32> -> vector<8x32xf32>
    %c0_29 = arith.constant 0 : index
    %c0_30 = arith.constant 0 : index
    %36 = vector.load %arg6[%c0_29, %c0_30] : memref<21x32xf32, #tpu.memory_space<vmem>>, vector<21x32xf32>
    %cst_31 = arith.constant dense<0.000000e+00> : vector<8x32xf32>
    %37 = tpu.matmul %33, %36, %cst_31 {dimension_numbers = #tpu.dot_dimension_numbers<[1], [0], [0], [1], [0, 0, 1, 1], [], []>} : vector<8x21xf32>, vector<21x32xf32>, vector<8x32xf32> -> vector<8x32xf32>
    %38 = arith.addf %35, %37 : vector<8x32xf32>
    %39 = vector.broadcast %3 : vector<1x32xf32> to vector<8x32xf32>
    %40 = arith.addf %38, %39 : vector<8x32xf32>
    %cst_32 = arith.constant 0.000000e+00 : f32
    %41 = vector.broadcast %cst_32 : f32 to vector<8x32xf32>
    %42 = arith.maximumf %40, %41 : vector<8x32xf32>
    %c0_33 = arith.constant 0 : index
    %c0_34 = arith.constant 0 : index
    %c0_35 = arith.constant 0 : index
    %43 = vector.load %arg7[%c0_33, %c0_34, %c0_35] : memref<3x32x32xf32, #tpu.memory_space<vmem>>, vector<1x32x32xf32>
    %44 = vector.shape_cast %43 : vector<1x32x32xf32> to vector<32x32xf32>
    %cst_36 = arith.constant dense<0.000000e+00> : vector<8x32xf32>
    %45 = tpu.matmul %42, %44, %cst_36 {dimension_numbers = #tpu.dot_dimension_numbers<[1], [0], [0], [1], [0, 0, 1, 1], [], []>} : vector<8x32xf32>, vector<32x32xf32>, vector<8x32xf32> -> vector<8x32xf32>
    %46 = vector.broadcast %5 : vector<1x32xf32> to vector<8x32xf32>
    %47 = arith.addf %45, %46 : vector<8x32xf32>
    %c1_37 = arith.constant 1 : index
    %c0_38 = arith.constant 0 : index
    %c0_39 = arith.constant 0 : index
    %48 = vector.load %arg7[%c1_37, %c0_38, %c0_39] : memref<3x32x32xf32, #tpu.memory_space<vmem>>, vector<1x32x32xf32>
    %49 = vector.shape_cast %48 : vector<1x32x32xf32> to vector<32x32xf32>
    %cst_40 = arith.constant dense<0.000000e+00> : vector<8x32xf32>
    %50 = tpu.matmul %42, %49, %cst_40 {dimension_numbers = #tpu.dot_dimension_numbers<[1], [0], [0], [1], [0, 0, 1, 1], [], []>} : vector<8x32xf32>, vector<32x32xf32>, vector<8x32xf32> -> vector<8x32xf32>
    %51 = vector.broadcast %6 : vector<1x32xf32> to vector<8x32xf32>
    %52 = arith.addf %50, %51 : vector<8x32xf32>
    %c2_41 = arith.constant 2 : index
    %c0_42 = arith.constant 0 : index
    %c0_43 = arith.constant 0 : index
    %53 = vector.load %arg7[%c2_41, %c0_42, %c0_43] : memref<3x32x32xf32, #tpu.memory_space<vmem>>, vector<1x32x32xf32>
    %54 = vector.shape_cast %53 : vector<1x32x32xf32> to vector<32x32xf32>
    %cst_44 = arith.constant dense<0.000000e+00> : vector<8x32xf32>
    %55 = tpu.matmul %42, %54, %cst_44 {dimension_numbers = #tpu.dot_dimension_numbers<[1], [0], [0], [1], [0, 0, 1, 1], [], []>} : vector<8x32xf32>, vector<32x32xf32>, vector<8x32xf32> -> vector<8x32xf32>
    %56 = vector.broadcast %7 : vector<1x32xf32> to vector<8x32xf32>
    %57 = arith.addf %55, %56 : vector<8x32xf32>
    %c0_45 = arith.constant 0 : index
    %c0_46 = arith.constant 0 : index
    %c0_47 = arith.constant 0 : index
    %58 = vector.load %arg8[%c0_45, %c0_46, %c0_47] : memref<3x32x32xf32, #tpu.memory_space<vmem>>, vector<1x32x32xf32>
    %59 = vector.shape_cast %58 : vector<1x32x32xf32> to vector<32x32xf32>
    %cst_48 = arith.constant dense<0.000000e+00> : vector<8x32xf32>
    %60 = tpu.matmul %1, %59, %cst_48 {dimension_numbers = #tpu.dot_dimension_numbers<[1], [0], [0], [1], [0, 0, 1, 1], [], []>} : vector<8x32xf32>, vector<32x32xf32>, vector<8x32xf32> -> vector<8x32xf32>
    %61 = vector.broadcast %8 : vector<1x32xf32> to vector<8x32xf32>
    %62 = arith.addf %60, %61 : vector<8x32xf32>
    %c1_49 = arith.constant 1 : index
    %c0_50 = arith.constant 0 : index
    %c0_51 = arith.constant 0 : index
    %63 = vector.load %arg8[%c1_49, %c0_50, %c0_51] : memref<3x32x32xf32, #tpu.memory_space<vmem>>, vector<1x32x32xf32>
    %64 = vector.shape_cast %63 : vector<1x32x32xf32> to vector<32x32xf32>
    %cst_52 = arith.constant dense<0.000000e+00> : vector<8x32xf32>
    %65 = tpu.matmul %1, %64, %cst_52 {dimension_numbers = #tpu.dot_dimension_numbers<[1], [0], [0], [1], [0, 0, 1, 1], [], []>} : vector<8x32xf32>, vector<32x32xf32>, vector<8x32xf32> -> vector<8x32xf32>
    %66 = vector.broadcast %9 : vector<1x32xf32> to vector<8x32xf32>
    %67 = arith.addf %65, %66 : vector<8x32xf32>
    %c2_53 = arith.constant 2 : index
    %c0_54 = arith.constant 0 : index
    %c0_55 = arith.constant 0 : index
    %68 = vector.load %arg8[%c2_53, %c0_54, %c0_55] : memref<3x32x32xf32, #tpu.memory_space<vmem>>, vector<1x32x32xf32>
    %69 = vector.shape_cast %68 : vector<1x32x32xf32> to vector<32x32xf32>
    %cst_56 = arith.constant dense<0.000000e+00> : vector<8x32xf32>
    %70 = tpu.matmul %1, %69, %cst_56 {dimension_numbers = #tpu.dot_dimension_numbers<[1], [0], [0], [1], [0, 0, 1, 1], [], []>} : vector<8x32xf32>, vector<32x32xf32>, vector<8x32xf32> -> vector<8x32xf32>
    %71 = vector.broadcast %10 : vector<1x32xf32> to vector<8x32xf32>
    %72 = arith.addf %70, %71 : vector<8x32xf32>
    %73 = arith.addf %47, %62 : vector<8x32xf32>
    %74 = arith.negf %73 : vector<8x32xf32>
    %75 = math.exp %74 : vector<8x32xf32>
    %cst_57 = arith.constant 1.000000e+00 : f32
    %76 = vector.broadcast %cst_57 : f32 to vector<8x32xf32>
    %77 = arith.addf %76, %75 : vector<8x32xf32>
    %78 = arith.divf %76, %77 : vector<8x32xf32>
    %79 = arith.addf %52, %67 : vector<8x32xf32>
    %80 = arith.negf %79 : vector<8x32xf32>
    %81 = math.exp %80 : vector<8x32xf32>
    %cst_58 = arith.constant 1.000000e+00 : f32
    %82 = vector.broadcast %cst_58 : f32 to vector<8x32xf32>
    %83 = arith.addf %82, %81 : vector<8x32xf32>
    %84 = arith.divf %82, %83 : vector<8x32xf32>
    %85 = arith.mulf %78, %72 : vector<8x32xf32>
    %86 = arith.addf %57, %85 : vector<8x32xf32>
    %87 = math.tanh %86 : vector<8x32xf32>
    %cst_59 = arith.constant 1.000000e+00 : f32
    %88 = vector.broadcast %cst_59 : f32 to vector<8x32xf32>
    %89 = arith.subf %88, %84 : vector<8x32xf32>
    %90 = arith.mulf %89, %87 : vector<8x32xf32>
    %91 = arith.mulf %84, %1 : vector<8x32xf32>
    %92 = arith.addf %90, %91 : vector<8x32xf32>
    %c0_60 = arith.constant 0 : index
    %c0_61 = arith.constant 0 : index
    %93 = vector.load %arg12[%c0_60, %c0_61] : memref<8x32xf32, #tpu.memory_space<vmem>>, vector<8x32xf32>
    tpu.vector_store %arg12[%c0_60, %c0_61], %92 {strides = array<i32>} : memref<8x32xf32, #tpu.memory_space<vmem>>, vector<8x32xf32>,
    %c0_62 = arith.constant 0 : index
    %c0_63 = arith.constant 0 : index
    %94 = vector.load %arg9[%c0_62, %c0_63] : memref<32x16xf32, #tpu.memory_space<vmem>>, vector<32x16xf32>
    %cst_64 = arith.constant dense<0.000000e+00> : vector<8x16xf32>
    %95 = tpu.matmul %92, %94, %cst_64 {dimension_numbers = #tpu.dot_dimension_numbers<[1], [0], [0], [1], [0, 0, 1, 1], [], []>} : vector<8x32xf32>, vector<32x16xf32>, vector<8x16xf32> -> vector<8x16xf32>
    %96 = vector.broadcast %4 : vector<1x16xf32> to vector<8x16xf32>
    %97 = arith.addf %95, %96 : vector<8x16xf32>
    %cst_65 = arith.constant dense<0xFF800000> : vector<8xf32>
    %98 = vector.multi_reduction <maximumf>, %97, %cst_65 [1] : vector<8x16xf32> to vector<8xf32>
    %99 = vector.shape_cast %98 : vector<8xf32> to vector<8x1xf32>
    %100 = vector.broadcast %99 : vector<8x1xf32> to vector<8x16xf32>
    %101 = arith.subf %97, %100 : vector<8x16xf32>
    %102 = math.exp %101 : vector<8x16xf32>
    %cst_66 = arith.constant dense<0.000000e+00> : vector<8xf32>
    %103 = vector.multi_reduction <add>, %102, %cst_66 [1] : vector<8x16xf32> to vector<8xf32>
    %104 = vector.shape_cast %103 : vector<8xf32> to vector<8x1xf32>
    %105 = math.log %104 : vector<8x1xf32>
    %106 = arith.addf %105, %99 : vector<8x1xf32>
    %107 = vector.broadcast %106 : vector<8x1xf32> to vector<8x16xf32>
    %108 = arith.subf %97, %107 : vector<8x16xf32>
    %c0_67 = arith.constant 0 : index
    %c0_68 = arith.constant 0 : index
    %109 = vector.load %arg11[%c0_67, %c0_68] : memref<8x16xf32, #tpu.memory_space<vmem>>, vector<8x16xf32>
    tpu.vector_store %arg11[%c0_67, %c0_68], %108 {strides = array<i32>} : memref<8x16xf32, #tpu.memory_space<vmem>>, vector<8x16xf32>,
    return
  }
}

</mosaic_0001>

<llo_original>
// kernel: attn_decoder_forward.1
$region0: #{attn_decoder_forward.1}
  #allocation0 [shape = 'u32[]', space=smem, size = 0x4, offset = 0x4, fixed_abs, tag = 'smem constant byte address 0x4 - core index']
  #allocation1 [shape = 'u32[144,128]{1,0:T(1,128)}', space=vmem, size = 0x12000, scoped, tag = 'internal scratch']
  %s0 = inlined_call_operand.vmem [shape: f32[8,32], index: 0, kind: input, shape index: {}]
  %s1 = inlined_call_operand.vmem [shape: f32[8,32], index: 1, kind: input, shape index: {}, may-alias: {1,12}]
  %s2 = inlined_call_operand.vmem [shape: f32[8,21,10], index: 2, kind: input, shape index: {}]
  %s3 = inlined_call_operand.vmem [shape: f32[32,10], index: 3, kind: input, shape index: {}]
  %s4 = inlined_call_operand.vmem [shape: f32[32,10], index: 4, kind: input, shape index: {}]
  %s5 = inlined_call_operand.vmem [shape: f32[32,32], index: 5, kind: input, shape index: {}]
  %s6 = inlined_call_operand.vmem [shape: f32[21,32], index: 6, kind: input, shape index: {}]
  %s7 = inlined_call_operand.vmem [shape: f32[3,32,32], index: 7, kind: input, shape index: {}]
  %s8 = inlined_call_operand.vmem [shape: f32[3,32,32], index: 8, kind: input, shape index: {}]
  %s9 = inlined_call_operand.vmem [shape: f32[32,16], index: 9, kind: input, shape index: {}]
  %s10 = inlined_call_operand.vmem [shape: f32[9,128], index: 10, kind: input, shape index: {}]
  %s11 = inlined_call_operand.vmem [shape: f32[8,16], index: 11, kind: output, shape index: {0}]
  %s12 = inlined_call_operand.vmem [shape: f32[8,32], index: 12, kind: output, shape index: {1}, may-alias: {1,12}]
  %s13 = inlined_call_operand.vmem [shape: f32[8,10], index: 13, kind: output, shape index: {2}]
  %14 = xla_tuple %s11, %s12, %s13
  %s15 = sld [smem:[#allocation0]]
  $region70: #{attn_decoder_forward.1} parent=0
    _
  %s17 = ssub.s32 1, %s15
  %s18 = scalar_select 0, %s17, %s15
  // Predicated region
  $region2: #{attn_decoder_forward.1} parent=0 // pred_check
    _
  $region3: #{attn_decoder_forward.1} parent=0 // pred_check_branch
    %20 = sbr.rel (0) target = $region5
  $region4: #{attn_decoder_forward.1} parent=0 // pred_region
    _
  $region5: #{attn_decoder_forward.1} parent=0 // pred_fallthru
    _
  // Predicated region
  $region6: #{attn_decoder_forward.1} parent=0 // pred_check
    _
  $region7: #{attn_decoder_forward.1} parent=0 // pred_check_branch
    %22 = sbr.rel (0) target = $region9
  $region8: #{attn_decoder_forward.1} parent=0 // pred_region
    _
  $region9: #{attn_decoder_forward.1} parent=0 // pred_fallthru
    _
  // Predicated region
  $region10: #{attn_decoder_forward.1} parent=0 // pred_check
    _
  $region11: #{attn_decoder_forward.1} parent=0 // pred_check_branch
    %24 = sbr.rel (0) target = $region13
  $region12: #{attn_decoder_forward.1} parent=0 // pred_region
    _
  $region13: #{attn_decoder_forward.1} parent=0 // pred_fallthru
    _
  // Predicated region
  $region14: #{attn_decoder_forward.1} parent=0 // pred_check
    _
  $region15: #{attn_decoder_forward.1} parent=0 // pred_check_branch
    %26 = sbr.rel (0) target = $region17
  $region16: #{attn_decoder_forward.1} parent=0 // pred_region
    _
  $region17: #{attn_decoder_forward.1} parent=0 // pred_fallthru
    _
  // Predicated region
  $region18: #{attn_decoder_forward.1} parent=0 // pred_check
    _
  $region19: #{attn_decoder_forward.1} parent=0 // pred_check_branch
    %28 = sbr.rel (0) target = $region21
  $region20: #{attn_decoder_forward.1} parent=0 // pred_region
    _
  $region21: #{attn_decoder_forward.1} parent=0 // pred_fallthru
    _
  // Predicated region
  $region22: #{attn_decoder_forward.1} parent=0 // pred_check
    _
  $region23: #{attn_decoder_forward.1} parent=0 // pred_check_branch
    %30 = sbr.rel (0) target = $region25
  $region24: #{attn_decoder_forward.1} parent=0 // pred_region
    _
  $region25: #{attn_decoder_forward.1} parent=0 // pred_fallthru
    _
  // Predicated region
  $region26: #{attn_decoder_forward.1} parent=0 // pred_check
    _
  $region27: #{attn_decoder_forward.1} parent=0 // pred_check_branch
    %32 = sbr.rel (0) target = $region29
  $region28: #{attn_decoder_forward.1} parent=0 // pred_region
    _
  $region29: #{attn_decoder_forward.1} parent=0 // pred_fallthru
    _
  // Predicated region
  $region30: #{attn_decoder_forward.1} parent=0 // pred_check
    _
  $region31: #{attn_decoder_forward.1} parent=0 // pred_check_branch
    %34 = sbr.rel (0) target = $region33
  $region32: #{attn_decoder_forward.1} parent=0 // pred_region
    _
  $region33: #{attn_decoder_forward.1} parent=0 // pred_fallthru
    _
  // Predicated region
  $region34: #{attn_decoder_forward.1} parent=0 // pred_check
    _
  $region35: #{attn_decoder_forward.1} parent=0 // pred_check_branch
    %36 = sbr.rel (0) target = $region37
  $region36: #{attn_decoder_forward.1} parent=0 // pred_region
    _
  $region37: #{attn_decoder_forward.1} parent=0 // pred_fallthru
    _
  // Predicated region
  $region38: #{attn_decoder_forward.1} parent=0 // pred_check
    _
  $region39: #{attn_decoder_forward.1} parent=0 // pred_check_branch
    %38 = sbr.rel (0) target = $region41
  $region40: #{attn_decoder_forward.1} parent=0 // pred_region
    _
  $region41: #{attn_decoder_forward.1} parent=0 // pred_fallthru
    _
  // Predicated region
  $region42: #{attn_decoder_forward.1} parent=0 // pred_check
    _
  $region43: #{attn_decoder_forward.1} parent=0 // pred_check_branch
    %40 = sbr.rel (0) target = $region45
  $region44: #{attn_decoder_forward.1} parent=0 // pred_region
    _
  $region45: #{attn_decoder_forward.1} parent=0 // pred_fallthru
    _
  %v41 = vld [vmem:[%s0] sm:$0xff]
  %v42 = vld [vmem:[%s1] sm:$0xff]
  %v43 = vld [vmem:[%s10] sm:$0x1]
  %v44 = vld [vmem:[%s10 + $0x1] sm:$0x1]
  %v45 = vld [vmem:[%s10 + $0x2] sm:$0x1]
  %v46 = vld [vmem:[%s10 + $0x3] sm:$0x1]
  %v47 = vld [vmem:[%s10 + $0x4] sm:$0x1]
  %v48 = vld [vmem:[%s10 + $0x5] sm:$0x1]
  %v49 = vld [vmem:[%s10 + $0x6] sm:$0x1]
  %v50 = vld [vmem:[%s10 + $0x7] sm:$0x1]
  %v51 = vld [vmem:[%s10 + $0x8] sm:$0x1]
  %v52 = vld [vmem:[%s3] sm:$0xff]
  %v53 = vld [vmem:[%s3 + $0x8] sm:$0xff]
  %v54 = vld [vmem:[%s3 + $0x10] sm:$0xff]
  %v55 = vld [vmem:[%s3 + $0x18] sm:$0xff]
  %v56 = vld [vmem:[%s4] sm:$0xff]
  %v57 = vld [vmem:[%s4 + $0x8] sm:$0xff]
  %v58 = vld [vmem:[%s4 + $0x10] sm:$0xff]
  %v59 = vld [vmem:[%s4 + $0x18] sm:$0xff]
  %vm60 = vcmask 261120
  %v62 = vsel %vm60, %v42, 0
  %64 = vmatprep.subr.mxu0 0.0
  %65 = vmatpush1.msra.mxu0 %v56
  %66 = vmatprep.subr.mxu0 0.0
  %67 = vmatpush1.msra.mxu0 %v57
  %68 = vmatprep.subr.mxu0 0.0
  %69 = vmatpush1.msra.mxu0 %v58
  %70 = vmatprep.subr.mxu0 0.0
  %71 = vmatpush1.msra.mxu0 %v59
  %72 = vmatprep.subr.mxu0 0.0
  %73 = vmatpush1.msra.mxu0 0.0
  %74 = vmatprep.subr.mxu0 0.0
  %75 = vmatpush1.msra.mxu0 0.0
  %76 = vmatprep.subr.mxu0 0.0
  %77 = vmatpush1.msra.mxu0 0.0
  %78 = vmatprep.subr.mxu0 0.0
  %79 = vmatpush1.msra.mxu0 0.0
  %80 = vmatprep.subr.mxu0 0.0
  %81 = vmatpush1.msra.mxu0 0.0
  %82 = vmatprep.subr.mxu0 0.0
  %83 = vmatpush1.msra.mxu0 0.0
  %84 = vmatprep.subr.mxu0 0.0
  %85 = vmatpush1.msra.mxu0 0.0
  %86 = vmatprep.subr.mxu0 0.0
  %87 = vmatpush1.msra.mxu0 0.0
  %88 = vmatprep.subr.mxu0 0.0
  %89 = vmatpush1.msra.mxu0 0.0
  %90 = vmatprep.subr.mxu0 0.0
  %91 = vmatpush1.msra.mxu0 0.0
  %92 = vmatprep.subr.mxu0 0.0
  %93 = vmatpush1.msra.mxu0 0.0
  %94 = vmatprep.subr.mxu0 0.0
  %95 = vmatpush1.msra.mxu0 0.0
  %96 = vmatprep.subr.mxu0 0.0
  %97 = vmatpush1.msra.mxu0 0.0
  %98 = vmatprep.subr.mxu0 0.0
  %99 = vmatpush1.msra.mxu0 0.0
  %100 = vmatprep.subr.mxu0 0.0
  %101 = vmatpush1.msra.mxu0 0.0
  %102 = vmatprep.subr.mxu0 0.0
  %103 = vmatpush1.msra.mxu0 0.0
  %104 = vmatprep.subr.mxu0 0.0
  %105 = vmatpush1.msra.mxu0 0.0
  %106 = vmatprep.subr.mxu0 0.0
  %107 = vmatpush1.msra.mxu0 0.0
  %108 = vmatprep.subr.mxu0 0.0
  %109 = vmatpush1.msra.mxu0 0.0
  %110 = vmatprep.subr.mxu0 0.0
  %111 = vmatpush1.msra.mxu0 0.0
  %112 = vmatprep.subr.mxu0 0.0
  %113 = vmatpush1.msra.mxu0 0.0
  %114 = vmatprep.subr.mxu0 0.0
  %115 = vmatpush1.msra.mxu0 0.0
  %116 = vmatprep.subr.mxu0 0.0
  %117 = vmatpush1.msra.mxu0 0.0
  %118 = vmatprep.subr.mxu0 0.0
  %119 = vmatpush1.msra.mxu0 0.0
  %120 = vmatprep.subr.mxu0 0.0
  %121 = vmatpush1.msra.mxu0 0.0
  %122 = vmatprep.subr.mxu0 0.0
  %123 = vmatpush1.msra.mxu0 0.0
  %124 = vmatprep.subr.mxu0 0.0
  %125 = vmatpush1.msra.mxu0 0.0
  %126 = vmatprep.subr.mxu0 0.0
  %127 = vmatpush1.msra.mxu0 0.0
  %128 = vmatprep.mubr.f32.mxu0 0.0
  %129 = vmatmul.mubr.f32.gmra.mrb[0].mxu0 %v62
  %v130 = vpop.f32.mrb[0].mxu0
  %v131 = vadd.f32 0.0, %v130
  %v132 = vpop.f32.mrb[0].mxu0
  %133 = vdwg.mxu0
  %v135 = vsel %vm60, %v41, 0
  %137 = vmatprep.subr.mxu0 0.0
  %138 = vmatpush1.msra.mxu0 %v52
  %139 = vmatprep.subr.mxu0 0.0
  %140 = vmatpush1.msra.mxu0 %v53
  %141 = vmatprep.subr.mxu0 0.0
  %142 = vmatpush1.msra.mxu0 %v54
  %143 = vmatprep.subr.mxu0 0.0
  %144 = vmatpush1.msra.mxu0 %v55
  %145 = vmatprep.subr.mxu0 0.0
  %146 = vmatpush1.msra.mxu0 0.0
  %147 = vmatprep.subr.mxu0 0.0
  %148 = vmatpush1.msra.mxu0 0.0
  %149 = vmatprep.subr.mxu0 0.0
  %150 = vmatpush1.msra.mxu0 0.0
  %151 = vmatprep.subr.mxu0 0.0
  %152 = vmatpush1.msra.mxu0 0.0
  %153 = vmatprep.subr.mxu0 0.0
  %154 = vmatpush1.msra.mxu0 0.0
  %155 = vmatprep.subr.mxu0 0.0
  %156 = vmatpush1.msra.mxu0 0.0
  %157 = vmatprep.subr.mxu0 0.0
  %158 = vmatpush1.msra.mxu0 0.0
  %159 = vmatprep.subr.mxu0 0.0
  %160 = vmatpush1.msra.mxu0 0.0
  %161 = vmatprep.subr.mxu0 0.0
  %162 = vmatpush1.msra.mxu0 0.0
  %163 = vmatprep.subr.mxu0 0.0
  %164 = vmatpush1.msra.mxu0 0.0
  %165 = vmatprep.subr.mxu0 0.0
  %166 = vmatpush1.msra.mxu0 0.0
  %167 = vmatprep.subr.mxu0 0.0
  %168 = vmatpush1.msra.mxu0 0.0
  %169 = vmatprep.subr.mxu0 0.0
  %170 = vmatpush1.msra.mxu0 0.0
  %171 = vmatprep.subr.mxu0 0.0
  %172 = vmatpush1.msra.mxu0 0.0
  %173 = vmatprep.subr.mxu0 0.0
  %174 = vmatpush1.msra.mxu0 0.0
  %175 = vmatprep.subr.mxu0 0.0
  %176 = vmatpush1.msra.mxu0 0.0
  %177 = vmatprep.subr.mxu0 0.0
  %178 = vmatpush1.msra.mxu0 0.0
  %179 = vmatprep.subr.mxu0 0.0
  %180 = vmatpush1.msra.mxu0 0.0
  %181 = vmatprep.subr.mxu0 0.0
  %182 = vmatpush1.msra.mxu0 0.0
  %183 = vmatprep.subr.mxu0 0.0
  %184 = vmatpush1.msra.mxu0 0.0
  %185 = vmatprep.subr.mxu0 0.0
  %186 = vmatpush1.msra.mxu0 0.0
  %187 = vmatprep.subr.mxu0 0.0
  %188 = vmatpush1.msra.mxu0 0.0
  %189 = vmatprep.subr.mxu0 0.0
  %190 = vmatpush1.msra.mxu0 0.0
  %191 = vmatprep.subr.mxu0 0.0
  %192 = vmatpush1.msra.mxu0 0.0
  %193 = vmatprep.subr.mxu0 0.0
  %194 = vmatpush1.msra.mxu0 0.0
  %195 = vmatprep.subr.mxu0 0.0
  %196 = vmatpush1.msra.mxu0 0.0
  %197 = vmatprep.subr.mxu0 0.0
  %198 = vmatpush1.msra.mxu0 0.0
  %199 = vmatprep.subr.mxu0 0.0
  %200 = vmatpush1.msra.mxu0 0.0
  %201 = vmatprep.mubr.f32.mxu0 0.0
  %202 = vmatmul.mubr.f32.gmra.mrb[0].mxu0 %v135
  %v203 = vpop.f32.mrb[0].mxu0
  %v204 = vadd.f32 %v131, %v203
  %v205 = vpop.f32.mrb[0].mxu0
  %206 = vdwg.mxu0
  %v207 = vlaneseq
  %v208 = vshrl.u32 %v207, 7
  %v209 = vsub.s32 0, %v208
  %v210 = vrot.slane %v43, %v209
  %v211 = vadd.f32 %v204, %v210
  %vm212 = vcmask 80896
  %v213 = vsel %vm212, %v211, -inf
  %214 = vmax.xlane.f32.xlu0 %v213
  %v215 = vpop.xlane.xlu0 %214
  %v216 = vsub.f32 %v211, %v215
  %v217 = vmul.f32 %v216, 1.442695
  %v218 = vpow.pop %v217
  %v219 = vsel %vm212, %v218, 0.0
  %220 = vadd.xlane.f32.xlu0 %v219
  %v221 = vpop.xlane.xlu0 %220
  %v222 = vrcp.pop %v221
  %v223 = vmul.f32 %v218, %v222
  %224 = vst.msk [vmem:[%s13] sm:$0xff] %vm212, %v223
  %v225 = vld [vmem:[%s2] sm:$0xff]
  %v226 = vld [vmem:[%s2 + $0x8] sm:$0xff]
  %v227 = vld [vmem:[%s2 + $0x10] sm:$0x1f]
  %v228 = vld [vmem:[%s2 + $0x18] sm:$0xff]
  %v229 = vld [vmem:[%s2 + $0x20] sm:$0xff]
  %v230 = vld [vmem:[%s2 + $0x28] sm:$0x1f]
  %v231 = vld [vmem:[%s2 + $0x30] sm:$0xff]
  %v232 = vld [vmem:[%s2 + $0x38] sm:$0xff]
  %v233 = vld [vmem:[%s2 + $0x40] sm:$0x1f]
  %v234 = vld [vmem:[%s2 + $0x48] sm:$0xff]
  %v235 = vld [vmem:[%s2 + $0x50] sm:$0xff]
  %v236 = vld [vmem:[%s2 + $0x58] sm:$0x1f]
  %v237 = vld [vmem:[%s2 + $0x60] sm:$0xff]
  %v238 = vld [vmem:[%s2 + $0x68] sm:$0xff]
  %v239 = vld [vmem:[%s2 + $0x70] sm:$0x1f]
  %v240 = vld [vmem:[%s2 + $0x78] sm:$0xff]
  %v241 = vld [vmem:[%s2 + $0x80] sm:$0xff]
  %v242 = vld [vmem:[%s2 + $0x88] sm:$0x1f]
  %v243 = vld [vmem:[%s2 + $0x90] sm:$0xff]
  %v244 = vld [vmem:[%s2 + $0x98] sm:$0xff]
  %v245 = vld [vmem:[%s2 + $0xa0] sm:$0x1f]
  %v246 = vld [vmem:[%s2 + $0xa8] sm:$0xff]
  %v247 = vld [vmem:[%s2 + $0xb0] sm:$0xff]
  %v248 = vld [vmem:[%s2 + $0xb8] sm:$0x1f]
  %v250 = vcombine.high %v223, %v223
  %v252 = vunpack.c.l.s4 1966171168
  %v253 = vunpack.c.0.s8 %v252
  %v254 = vlaneseq
  %v255 = vshrl.u32 %v254, 7
  %v256 = vsub.s32 %v253, %v255
  %v257 = vrot.slane %v223, %v256
  %v259 = vunpack.c.l.s4 1966171168
  %v260 = vunpack.c.0.s8 %v259
  %v261 = vlaneseq
  %v262 = vshrl.u32 %v261, 7
  %v263 = vsub.s32 %v260, %v262
  %v264 = vrot.slane %v250, %v263
  %v265 = vcombine.high %v257, %v257
  %v266 = vcombine.high %v264, %v264
  %v268 = vunpack.c.l.s4 1966171168
  %v269 = vunpack.c.0.s8 %v268
  %v270 = vlaneseq
  %v271 = vshrl.u32 %v270, 7
  %v272 = vsub.s32 %v269, %v271
  %v273 = vrot.slane %v257, %v272
  %v275 = vunpack.c.l.s4 1966171168
  %v276 = vunpack.c.0.s8 %v275
  %v277 = vlaneseq
  %v278 = vshrl.u32 %v277, 7
  %v279 = vsub.s32 %v276, %v278
  %v280 = vrot.slane %v264, %v279
  %v282 = vunpack.c.l.s4 1966171168
  %v283 = vunpack.c.0.s8 %v282
  %v284 = vlaneseq
  %v285 = vshrl.u32 %v284, 7
  %v286 = vsub.s32 %v283, %v285
  %v287 = vrot.slane %v265, %v286
  %v289 = vunpack.c.l.s4 1966171168
  %v290 = vunpack.c.0.s8 %v289
  %v291 = vlaneseq
  %v292 = vshrl.u32 %v291, 7
  %v293 = vsub.s32 %v290, %v292
  %v294 = vrot.slane %v266, %v293
  %v295 = vcombine.high %v273, %v273
  %v296 = vcombine.high %v280, %v280
  %v297 = vcombine.high %v287, %v287
  %v298 = vcombine.high %v294, %v294
  %v299 = vlaneseq
  %v300 = vshrl.u32 %v299, 7
  %v301 = vsub.s32 0, %v300
  %v302 = vrot.slane %v273, %v301
  %v303 = vlaneseq
  %v304 = vshrl.u32 %v303, 7
  %v305 = vsub.s32 0, %v304
  %v306 = vrot.slane %v287, %v305
  %v307 = vlaneseq
  %v308 = vshrl.u32 %v307, 7
  %v309 = vsub.s32 0, %v308
  %v310 = vrot.slane %v295, %v309
  %v311 = vlaneseq
  %v312 = vshrl.u32 %v311, 7
  %v313 = vsub.s32 0, %v312
  %v314 = vrot.slane %v297, %v313
  %v315 = vlaneseq
  %v316 = vshrl.u32 %v315, 7
  %v317 = vsub.s32 0, %v316
  %v318 = vrot.slane %v280, %v317
  %v319 = vlaneseq
  %v320 = vshrl.u32 %v319, 7
  %v321 = vsub.s32 0, %v320
  %v322 = vrot.slane %v294, %v321
  %v323 = vlaneseq
  %v324 = vshrl.u32 %v323, 7
  %v325 = vsub.s32 0, %v324
  %v326 = vrot.slane %v296, %v325
  %v327 = vlaneseq
  %v328 = vshrl.u32 %v327, 7
  %v329 = vsub.s32 0, %v328
  %v330 = vrot.slane %v298, %v329
  %v339 = vmul.f32 %v225, %v302
  %v340 = vmul.f32 %v226, %v302
  %v341 = vmul.f32 %v227, %v302
  %v342 = vmul.f32 %v228, %v306
  %v343 = vmul.f32 %v229, %v306
  %v344 = vmul.f32 %v230, %v306
  %v345 = vmul.f32 %v231, %v310
  %v346 = vmul.f32 %v232, %v310
  %v347 = vmul.f32 %v233, %v310
  %v348 = vmul.f32 %v234, %v314
  %v349 = vmul.f32 %v235, %v314
  %v350 = vmul.f32 %v236, %v314
  %v351 = vmul.f32 %v237, %v318
  %v352 = vmul.f32 %v238, %v318
  %v353 = vmul.f32 %v239, %v318
  %v354 = vmul.f32 %v240, %v322
  %v355 = vmul.f32 %v241, %v322
  %v356 = vmul.f32 %v242, %v322
  %v357 = vmul.f32 %v243, %v326
  %v358 = vmul.f32 %v244, %v326
  %v359 = vmul.f32 %v245, %v326
  %v360 = vmul.f32 %v246, %v330
  %v361 = vmul.f32 %v247, %v330
  %v362 = vmul.f32 %v248, %v330
  %v363 = vsel %vm212, %v339, 0.0
  %364 = vadd.xlane.f32.xlu0 %v363
  %v365 = vpop.xlane.xlu0 %364
  %v366 = vsel %vm212, %v340, 0.0
  %367 = vadd.xlane.f32.xlu0 %v366
  %v368 = vpop.xlane.xlu0 %367
  %vm369 = vcmask 77824
  %v370 = vsel %vm369, %v341, 0.0
  %371 = vadd.xlane.f32.xlu0 %v370
  %v372 = vpop.xlane.xlu0 %371
  %v373 = vsel %vm212, %v342, 0.0
  %374 = vadd.xlane.f32.xlu0 %v373
  %v375 = vpop.xlane.xlu0 %374
  %v376 = vsel %vm212, %v343, 0.0
  %377 = vadd.xlane.f32.xlu0 %v376
  %v378 = vpop.xlane.xlu0 %377
  %v379 = vsel %vm369, %v344, 0.0
  %380 = vadd.xlane.f32.xlu0 %v379
  %v381 = vpop.xlane.xlu0 %380
  %v382 = vsel %vm212, %v345, 0.0
  %383 = vadd.xlane.f32.xlu0 %v382
  %v384 = vpop.xlane.xlu0 %383
  %v385 = vsel %vm212, %v346, 0.0
  %386 = vadd.xlane.f32.xlu0 %v385
  %v387 = vpop.xlane.xlu0 %386
  %v388 = vsel %vm369, %v347, 0.0
  %389 = vadd.xlane.f32.xlu0 %v388
  %v390 = vpop.xlane.xlu0 %389
  %v391 = vsel %vm212, %v348, 0.0
  %392 = vadd.xlane.f32.xlu0 %v391
  %v393 = vpop.xlane.xlu0 %392
  %v394 = vsel %vm212, %v349, 0.0
  %395 = vadd.xlane.f32.xlu0 %v394
  %v396 = vpop.xlane.xlu0 %395
  %v397 = vsel %vm369, %v350, 0.0
  %398 = vadd.xlane.f32.xlu0 %v397
  %v399 = vpop.xlane.xlu0 %398
  %v400 = vsel %vm212, %v351, 0.0
  %401 = vadd.xlane.f32.xlu0 %v400
  %v402 = vpop.xlane.xlu0 %401
  %v403 = vsel %vm212, %v352, 0.0
  %404 = vadd.xlane.f32.xlu0 %v403
  %v405 = vpop.xlane.xlu0 %404
  %v406 = vsel %vm369, %v353, 0.0
  %407 = vadd.xlane.f32.xlu0 %v406
  %v408 = vpop.xlane.xlu0 %407
  %v409 = vsel %vm212, %v354, 0.0
  %410 = vadd.xlane.f32.xlu0 %v409
  %v411 = vpop.xlane.xlu0 %410
  %v412 = vsel %vm212, %v355, 0.0
  %413 = vadd.xlane.f32.xlu0 %v412
  %v414 = vpop.xlane.xlu0 %413
  %v415 = vsel %vm369, %v356, 0.0
  %416 = vadd.xlane.f32.xlu0 %v415
  %v417 = vpop.xlane.xlu0 %416
  %v418 = vsel %vm212, %v357, 0.0
  %419 = vadd.xlane.f32.xlu0 %v418
  %v420 = vpop.xlane.xlu0 %419
  %v421 = vsel %vm212, %v358, 0.0
  %422 = vadd.xlane.f32.xlu0 %v421
  %v423 = vpop.xlane.xlu0 %422
  %v424 = vsel %vm369, %v359, 0.0
  %425 = vadd.xlane.f32.xlu0 %v424
  %v426 = vpop.xlane.xlu0 %425
  %v427 = vsel %vm212, %v360, 0.0
  %428 = vadd.xlane.f32.xlu0 %v427
  %v429 = vpop.xlane.xlu0 %428
  %v430 = vsel %vm212, %v361, 0.0
  %431 = vadd.xlane.f32.xlu0 %v430
  %v432 = vpop.xlane.xlu0 %431
  %v433 = vsel %vm369, %v362, 0.0
  %434 = vadd.xlane.f32.xlu0 %v433
  %v435 = vpop.xlane.xlu0 %434
  %v436 = vld [vmem:[%s5] sm:$0xff]
  %v437 = vld [vmem:[%s5 + $0x8] sm:$0xff]
  %v438 = vld [vmem:[%s5 + $0x10] sm:$0xff]
  %v439 = vld [vmem:[%s5 + $0x18] sm:$0xff]
  %v440 = vld [vmem:[%s6] sm:$0xff]
  %v441 = vld [vmem:[%s6 + $0x8] sm:$0xff]
  %v442 = vld [vmem:[%s6 + $0x10] sm:$0x1f]
  %v467 = vlaneseq
  %v468 = vand.u32 %v467, 127
  %v469 = vlaneseq
  %v470 = vshrl.u32 %v469, 7
  %v471 = vsub.s32 %v468, %v470
  %v472 = vrot.slane %v365, %v471
  %v473 = vadd.s32 %v468, 4294967288
  %v474 = vlaneseq
  %v475 = vshrl.u32 %v474, 7
  %v476 = vsub.s32 %v473, %v475
  %v477 = vrot.slane %v368, %v476
  %vm478 = vcmask 130112
  %v479 = vsel %vm478, %v477, %v472
  %v480 = vadd.s32 %v468, 4294967280
  %v481 = vlaneseq
  %v482 = vshrl.u32 %v481, 7
  %v483 = vsub.s32 %v480, %v482
  %v484 = vrot.slane %v372, %v483
  %vm485 = vcmask 195712
  %v486 = vsel %vm485, %v484, %v479
  %v487 = vlaneseq
  %v488 = vshrl.u32 %v487, 7
  %v489 = vsub.s32 %v468, %v488
  %v490 = vrot.slane %v375, %v489
  %v491 = vlaneseq
  %v492 = vshrl.u32 %v491, 7
  %v493 = vsub.s32 %v473, %v492
  %v494 = vrot.slane %v378, %v493
  %v495 = vsel %vm478, %v494, %v490
  %v496 = vlaneseq
  %v497 = vshrl.u32 %v496, 7
  %v498 = vsub.s32 %v480, %v497
  %v499 = vrot.slane %v381, %v498
  %v500 = vsel %vm485, %v499, %v495
  %v501 = vlaneseq
  %v502 = vshrl.u32 %v501, 7
  %v503 = vsub.s32 %v468, %v502
  %v504 = vrot.slane %v384, %v503
  %v505 = vlaneseq
  %v506 = vshrl.u32 %v505, 7
  %v507 = vsub.s32 %v473, %v506
  %v508 = vrot.slane %v387, %v507
  %v509 = vsel %vm478, %v508, %v504
  %v510 = vlaneseq
  %v511 = vshrl.u32 %v510, 7
  %v512 = vsub.s32 %v480, %v511
  %v513 = vrot.slane %v390, %v512
  %v514 = vsel %vm485, %v513, %v509
  %v515 = vlaneseq
  %v516 = vshrl.u32 %v515, 7
  %v517 = vsub.s32 %v468, %v516
  %v518 = vrot.slane %v393, %v517
  %v519 = vlaneseq
  %v520 = vshrl.u32 %v519, 7
  %v521 = vsub.s32 %v473, %v520
  %v522 = vrot.slane %v396, %v521
  %v523 = vsel %vm478, %v522, %v518
  %v524 = vlaneseq
  %v525 = vshrl.u32 %v524, 7
  %v526 = vsub.s32 %v480, %v525
  %v527 = vrot.slane %v399, %v526
  %v528 = vsel %vm485, %v527, %v523
  %v529 = vlaneseq
  %v530 = vshrl.u32 %v529, 7
  %v531 = vsub.s32 %v468, %v530
  %v532 = vrot.slane %v402, %v531
  %v533 = vlaneseq
  %v534 = vshrl.u32 %v533, 7
  %v535 = vsub.s32 %v473, %v534
  %v536 = vrot.slane %v405, %v535
  %v537 = vsel %vm478, %v536, %v532
  %v538 = vlaneseq
  %v539 = vshrl.u32 %v538, 7
  %v540 = vsub.s32 %v480, %v539
  %v541 = vrot.slane %v408, %v540
  %v542 = vsel %vm485, %v541, %v537
  %v543 = vlaneseq
  %v544 = vshrl.u32 %v543, 7
  %v545 = vsub.s32 %v468, %v544
  %v546 = vrot.slane %v411, %v545
  %v547 = vlaneseq
  %v548 = vshrl.u32 %v547, 7
  %v549 = vsub.s32 %v473, %v548
  %v550 = vrot.slane %v414, %v549
  %v551 = vsel %vm478, %v550, %v546
  %v552 = vlaneseq
  %v553 = vshrl.u32 %v552, 7
  %v554 = vsub.s32 %v480, %v553
  %v555 = vrot.slane %v417, %v554
  %v556 = vsel %vm485, %v555, %v551
  %v557 = vlaneseq
  %v558 = vshrl.u32 %v557, 7
  %v559 = vsub.s32 %v468, %v558
  %v560 = vrot.slane %v420, %v559
  %v561 = vlaneseq
  %v562 = vshrl.u32 %v561, 7
  %v563 = vsub.s32 %v473, %v562
  %v564 = vrot.slane %v423, %v563
  %v565 = vsel %vm478, %v564, %v560
  %v566 = vlaneseq
  %v567 = vshrl.u32 %v566, 7
  %v568 = vsub.s32 %v480, %v567
  %v569 = vrot.slane %v426, %v568
  %v570 = vsel %vm485, %v569, %v565
  %v571 = vlaneseq
  %v572 = vshrl.u32 %v571, 7
  %v573 = vsub.s32 %v468, %v572
  %v574 = vrot.slane %v429, %v573
  %v575 = vlaneseq
  %v576 = vshrl.u32 %v575, 7
  %v577 = vsub.s32 %v473, %v576
  %v578 = vrot.slane %v432, %v577
  %v579 = vsel %vm478, %v578, %v574
  %v580 = vlaneseq
  %v581 = vshrl.u32 %v580, 7
  %v582 = vsub.s32 %v480, %v581
  %v583 = vrot.slane %v435, %v582
  %v584 = vsel %vm485, %v583, %v579
  %vm585 = vcmask 1041409
  %v586 = vsel %vm585, %v500, %v486
  %vm587 = vcmask 1042434
  %v588 = vsel %vm587, %v514, %v586
  %vm589 = vcmask 1043459
  %v590 = vsel %vm589, %v528, %v588
  %vm591 = vcmask 1044484
  %v592 = vsel %vm591, %v542, %v590
  %vm593 = vcmask 1045509
  %v594 = vsel %vm593, %v556, %v592
  %vm595 = vcmask 1046534
  %v596 = vsel %vm595, %v570, %v594
  %vm597 = vcmask 1047559
  %v598 = vsel %vm597, %v584, %v596
  %vm599 = vcmask 171008
  %v600 = vsel %vm599, %v598, 0
  %vm602 = vcmask 1044480
  %v604 = vsel %vm602, %v442, 0
  %606 = vmatprep.subr.mxu0 0.0
  %607 = vmatpush1.msra.mxu0 %v440
  %608 = vmatprep.subr.mxu0 0.0
  %609 = vmatpush1.msra.mxu0 %v441
  %610 = vmatprep.subr.mxu0 0.0
  %611 = vmatpush1.msra.mxu0 %v604
  %612 = vmatprep.subr.mxu0 0.0
  %613 = vmatpush1.msra.mxu0 0.0
  %614 = vmatprep.subr.mxu0 0.0
  %615 = vmatpush1.msra.mxu0 0.0
  %616 = vmatprep.subr.mxu0 0.0
  %617 = vmatpush1.msra.mxu0 0.0
  %618 = vmatprep.subr.mxu0 0.0
  %619 = vmatpush1.msra.mxu0 0.0
  %620 = vmatprep.subr.mxu0 0.0
  %621 = vmatpush1.msra.mxu0 0.0
  %622 = vmatprep.subr.mxu0 0.0
  %623 = vmatpush1.msra.mxu0 0.0
  %624 = vmatprep.subr.mxu0 0.0
  %625 = vmatpush1.msra.mxu0 0.0
  %626 = vmatprep.subr.mxu0 0.0
  %627 = vmatpush1.msra.mxu0 0.0
  %628 = vmatprep.subr.mxu0 0.0
  %629 = vmatpush1.msra.mxu0 0.0
  %630 = vmatprep.subr.mxu0 0.0
  %631 = vmatpush1.msra.mxu0 0.0
  %632 = vmatprep.subr.mxu0 0.0
  %633 = vmatpush1.msra.mxu0 0.0
  %634 = vmatprep.subr.mxu0 0.0
  %635 = vmatpush1.msra.mxu0 0.0
  %636 = vmatprep.subr.mxu0 0.0
  %637 = vmatpush1.msra.mxu0 0.0
  %638 = vmatprep.subr.mxu0 0.0
  %639 = vmatpush1.msra.mxu0 0.0
  %640 = vmatprep.subr.mxu0 0.0
  %641 = vmatpush1.msra.mxu0 0.0
  %642 = vmatprep.subr.mxu0 0.0
  %643 = vmatpush1.msra.mxu0 0.0
  %644 = vmatprep.subr.mxu0 0.0
  %645 = vmatpush1.msra.mxu0 0.0
  %646 = vmatprep.subr.mxu0 0.0
  %647 = vmatpush1.msra.mxu0 0.0
  %648 = vmatprep.subr.mxu0 0.0
  %649 = vmatpush1.msra.mxu0 0.0
  %650 = vmatprep.subr.mxu0 0.0
  %651 = vmatpush1.msra.mxu0 0.0
  %652 = vmatprep.subr.mxu0 0.0
  %653 = vmatpush1.msra.mxu0 0.0
  %654 = vmatprep.subr.mxu0 0.0
  %655 = vmatpush1.msra.mxu0 0.0
  %656 = vmatprep.subr.mxu0 0.0
  %657 = vmatpush1.msra.mxu0 0.0
  %658 = vmatprep.subr.mxu0 0.0
  %659 = vmatpush1.msra.mxu0 0.0
  %660 = vmatprep.subr.mxu0 0.0
  %661 = vmatpush1.msra.mxu0 0.0
  %662 = vmatprep.subr.mxu0 0.0
  %663 = vmatpush1.msra.mxu0 0.0
  %664 = vmatprep.subr.mxu0 0.0
  %665 = vmatpush1.msra.mxu0 0.0
  %666 = vmatprep.subr.mxu0 0.0
  %667 = vmatpush1.msra.mxu0 0.0
  %668 = vmatprep.subr.mxu0 0.0
  %669 = vmatpush1.msra.mxu0 0.0
  %670 = vmatprep.mubr.f32.mxu0 0.0
  %671 = vmatmul.mubr.f32.gmra.mrb[0].mxu0 %v600
  %v672 = vpop.f32.mrb[0].mxu0
  %v673 = vadd.f32 0.0, %v672
  %v674 = vpop.f32.mrb[0].mxu0
  %675 = vdwg.mxu0
  %676 = vmatprep.subr.mxu0 0.0
  %677 = vmatpush1.msra.mxu0 %v436
  %678 = vmatprep.subr.mxu0 0.0
  %679 = vmatpush1.msra.mxu0 %v437
  %680 = vmatprep.subr.mxu0 0.0
  %681 = vmatpush1.msra.mxu0 %v438
  %682 = vmatprep.subr.mxu0 0.0
  %683 = vmatpush1.msra.mxu0 %v439
  %684 = vmatprep.subr.mxu0 0.0
  %685 = vmatpush1.msra.mxu0 0.0
  %686 = vmatprep.subr.mxu0 0.0
  %687 = vmatpush1.msra.mxu0 0.0
  %688 = vmatprep.subr.mxu0 0.0
  %689 = vmatpush1.msra.mxu0 0.0
  %690 = vmatprep.subr.mxu0 0.0
  %691 = vmatpush1.msra.mxu0 0.0
  %692 = vmatprep.subr.mxu0 0.0
  %693 = vmatpush1.msra.mxu0 0.0
  %694 = vmatprep.subr.mxu0 0.0
  %695 = vmatpush1.msra.mxu0 0.0
  %696 = vmatprep.subr.mxu0 0.0
  %697 = vmatpush1.msra.mxu0 0.0
  %698 = vmatprep.subr.mxu0 0.0
  %699 = vmatpush1.msra.mxu0 0.0
  %700 = vmatprep.subr.mxu0 0.0
  %701 = vmatpush1.msra.mxu0 0.0
  %702 = vmatprep.subr.mxu0 0.0
  %703 = vmatpush1.msra.mxu0 0.0
  %704 = vmatprep.subr.mxu0 0.0
  %705 = vmatpush1.msra.mxu0 0.0
  %706 = vmatprep.subr.mxu0 0.0
  %707 = vmatpush1.msra.mxu0 0.0
  %708 = vmatprep.subr.mxu0 0.0
  %709 = vmatpush1.msra.mxu0 0.0
  %710 = vmatprep.subr.mxu0 0.0
  %711 = vmatpush1.msra.mxu0 0.0
  %712 = vmatprep.subr.mxu0 0.0
  %713 = vmatpush1.msra.mxu0 0.0
  %714 = vmatprep.subr.mxu0 0.0
  %715 = vmatpush1.msra.mxu0 0.0
  %716 = vmatprep.subr.mxu0 0.0
  %717 = vmatpush1.msra.mxu0 0.0
  %718 = vmatprep.subr.mxu0 0.0
  %719 = vmatpush1.msra.mxu0 0.0
  %720 = vmatprep.subr.mxu0 0.0
  %721 = vmatpush1.msra.mxu0 0.0
  %722 = vmatprep.subr.mxu0 0.0
  %723 = vmatpush1.msra.mxu0 0.0
  %724 = vmatprep.subr.mxu0 0.0
  %725 = vmatpush1.msra.mxu0 0.0
  %726 = vmatprep.subr.mxu0 0.0
  %727 = vmatpush1.msra.mxu0 0.0
  %728 = vmatprep.subr.mxu0 0.0
  %729 = vmatpush1.msra.mxu0 0.0
  %730 = vmatprep.subr.mxu0 0.0
  %731 = vmatpush1.msra.mxu0 0.0
  %732 = vmatprep.subr.mxu0 0.0
  %733 = vmatpush1.msra.mxu0 0.0
  %734 = vmatprep.subr.mxu0 0.0
  %735 = vmatpush1.msra.mxu0 0.0
  %736 = vmatprep.subr.mxu0 0.0
  %737 = vmatpush1.msra.mxu0 0.0
  %738 = vmatprep.subr.mxu0 0.0
  %739 = vmatpush1.msra.mxu0 0.0
  %740 = vmatprep.mubr.f32.mxu0 0.0
  %741 = vmatmul.mubr.f32.gmra.mrb[0].mxu0 %v135
  %v742 = vpop.f32.mrb[0].mxu0
  %v743 = vadd.f32 %v673, %v742
  %v744 = vpop.f32.mrb[0].mxu0
  %745 = vdwg.mxu0
  %v746 = vlaneseq
  %v747 = vshrl.u32 %v746, 7
  %v748 = vsub.s32 0, %v747
  %v749 = vrot.slane %v44, %v748
  %v750 = vadd.f32 %v743, %v749
  %v751 = vmax.f32 %v750, 0.0
  %v752 = vld [vmem:[%s7] sm:$0xff]
  %v753 = vld [vmem:[%s7 + $0x8] sm:$0xff]
  %v754 = vld [vmem:[%s7 + $0x10] sm:$0xff]
  %v755 = vld [vmem:[%s7 + $0x18] sm:$0xff]
  %v756 = vlaneseq
  %v757 = vshrl.u32 %v756, 7
  %v758 = vsub.s32 0, %v757
  %v759 = vrot.slane %v46, %v758
  %v761 = vsel %vm60, %v751, 0
  %763 = vmatprep.subr.mxu0 0.0
  %764 = vmatpush1.msra.mxu0 %v752
  %765 = vmatprep.subr.mxu0 0.0
  %766 = vmatpush1.msra.mxu0 %v753
  %767 = vmatprep.subr.mxu0 0.0
  %768 = vmatpush1.msra.mxu0 %v754
  %769 = vmatprep.subr.mxu0 0.0
  %770 = vmatpush1.msra.mxu0 %v755
  %771 = vmatprep.subr.mxu0 0.0
  %772 = vmatpush1.msra.mxu0 0.0
  %773 = vmatprep.subr.mxu0 0.0
  %774 = vmatpush1.msra.mxu0 0.0
  %775 = vmatprep.subr.mxu0 0.0
  %776 = vmatpush1.msra.mxu0 0.0
  %777 = vmatprep.subr.mxu0 0.0
  %778 = vmatpush1.msra.mxu0 0.0
  %779 = vmatprep.subr.mxu0 0.0
  %780 = vmatpush1.msra.mxu0 0.0
  %781 = vmatprep.subr.mxu0 0.0
  %782 = vmatpush1.msra.mxu0 0.0
  %783 = vmatprep.subr.mxu0 0.0
  %784 = vmatpush1.msra.mxu0 0.0
  %785 = vmatprep.subr.mxu0 0.0
  %786 = vmatpush1.msra.mxu0 0.0
  %787 = vmatprep.subr.mxu0 0.0
  %788 = vmatpush1.msra.mxu0 0.0
  %789 = vmatprep.subr.mxu0 0.0
  %790 = vmatpush1.msra.mxu0 0.0
  %791 = vmatprep.subr.mxu0 0.0
  %792 = vmatpush1.msra.mxu0 0.0
  %793 = vmatprep.subr.mxu0 0.0
  %794 = vmatpush1.msra.mxu0 0.0
  %795 = vmatprep.subr.mxu0 0.0
  %796 = vmatpush1.msra.mxu0 0.0
  %797 = vmatprep.subr.mxu0 0.0
  %798 = vmatpush1.msra.mxu0 0.0
  %799 = vmatprep.subr.mxu0 0.0
  %800 = vmatpush1.msra.mxu0 0.0
  %801 = vmatprep.subr.mxu0 0.0
  %802 = vmatpush1.msra.mxu0 0.0
  %803 = vmatprep.subr.mxu0 0.0
  %804 = vmatpush1.msra.mxu0 0.0
  %805 = vmatprep.subr.mxu0 0.0
  %806 = vmatpush1.msra.mxu0 0.0
  %807 = vmatprep.subr.mxu0 0.0
  %808 = vmatpush1.msra.mxu0 0.0
  %809 = vmatprep.subr.mxu0 0.0
  %810 = vmatpush1.msra.mxu0 0.0
  %811 = vmatprep.subr.mxu0 0.0
  %812 = vmatpush1.msra.mxu0 0.0
  %813 = vmatprep.subr.mxu0 0.0
  %814 = vmatpush1.msra.mxu0 0.0
  %815 = vmatprep.subr.mxu0 0.0
  %816 = vmatpush1.msra.mxu0 0.0
  %817 = vmatprep.subr.mxu0 0.0
  %818 = vmatpush1.msra.mxu0 0.0
  %819 = vmatprep.subr.mxu0 0.0
  %820 = vmatpush1.msra.mxu0 0.0
  %821 = vmatprep.subr.mxu0 0.0
  %822 = vmatpush1.msra.mxu0 0.0
  %823 = vmatprep.subr.mxu0 0.0
  %824 = vmatpush1.msra.mxu0 0.0
  %825 = vmatprep.subr.mxu0 0.0
  %826 = vmatpush1.msra.mxu0 0.0
  %827 = vmatprep.mubr.f32.mxu0 0.0
  %828 = vmatmul.mubr.f32.gmra.mrb[0].mxu0 %v761
  %v829 = vpop.f32.mrb[0].mxu0
  %v830 = vadd.f32 %v759, %v829
  %v831 = vpop.f32.mrb[0].mxu0
  %832 = vdwg.mxu0
  %s833 = scalar_lea.vmem %s7, 32
  %v834 = vld [vmem:[%s833] sm:$0xff]
  %v835 = vld [vmem:[%s833 + $0x8] sm:$0xff]
  %v836 = vld [vmem:[%s833 + $0x10] sm:$0xff]
  %v837 = vld [vmem:[%s833 + $0x18] sm:$0xff]
  %v838 = vlaneseq
  %v839 = vshrl.u32 %v838, 7
  %v840 = vsub.s32 0, %v839
  %v841 = vrot.slane %v47, %v840
  %842 = vmatprep.subr.mxu0 0.0
  %843 = vmatpush1.msra.mxu0 %v834
  %844 = vmatprep.subr.mxu0 0.0
  %845 = vmatpush1.msra.mxu0 %v835
  %846 = vmatprep.subr.mxu0 0.0
  %847 = vmatpush1.msra.mxu0 %v836
  %848 = vmatprep.subr.mxu0 0.0
  %849 = vmatpush1.msra.mxu0 %v837
  %850 = vmatprep.subr.mxu0 0.0
  %851 = vmatpush1.msra.mxu0 0.0
  %852 = vmatprep.subr.mxu0 0.0
  %853 = vmatpush1.msra.mxu0 0.0
  %854 = vmatprep.subr.mxu0 0.0
  %855 = vmatpush1.msra.mxu0 0.0
  %856 = vmatprep.subr.mxu0 0.0
  %857 = vmatpush1.msra.mxu0 0.0
  %858 = vmatprep.subr.mxu0 0.0
  %859 = vmatpush1.msra.mxu0 0.0
  %860 = vmatprep.subr.mxu0 0.0
  %861 = vmatpush1.msra.mxu0 0.0
  %862 = vmatprep.subr.mxu0 0.0
  %863 = vmatpush1.msra.mxu0 0.0
  %864 = vmatprep.subr.mxu0 0.0
  %865 = vmatpush1.msra.mxu0 0.0
  %866 = vmatprep.subr.mxu0 0.0
  %867 = vmatpush1.msra.mxu0 0.0
  %868 = vmatprep.subr.mxu0 0.0
  %869 = vmatpush1.msra.mxu0 0.0
  %870 = vmatprep.subr.mxu0 0.0
  %871 = vmatpush1.msra.mxu0 0.0
  %872 = vmatprep.subr.mxu0 0.0
  %873 = vmatpush1.msra.mxu0 0.0
  %874 = vmatprep.subr.mxu0 0.0
  %875 = vmatpush1.msra.mxu0 0.0
  %876 = vmatprep.subr.mxu0 0.0
  %877 = vmatpush1.msra.mxu0 0.0
  %878 = vmatprep.subr.mxu0 0.0
  %879 = vmatpush1.msra.mxu0 0.0
  %880 = vmatprep.subr.mxu0 0.0
  %881 = vmatpush1.msra.mxu0 0.0
  %882 = vmatprep.subr.mxu0 0.0
  %883 = vmatpush1.msra.mxu0 0.0
  %884 = vmatprep.subr.mxu0 0.0
  %885 = vmatpush1.msra.mxu0 0.0
  %886 = vmatprep.subr.mxu0 0.0
  %887 = vmatpush1.msra.mxu0 0.0
  %888 = vmatprep.subr.mxu0 0.0
  %889 = vmatpush1.msra.mxu0 0.0
  %890 = vmatprep.subr.mxu0 0.0
  %891 = vmatpush1.msra.mxu0 0.0
  %892 = vmatprep.subr.mxu0 0.0
  %893 = vmatpush1.msra.mxu0 0.0
  %894 = vmatprep.subr.mxu0 0.0
  %895 = vmatpush1.msra.mxu0 0.0
  %896 = vmatprep.subr.mxu0 0.0
  %897 = vmatpush1.msra.mxu0 0.0
  %898 = vmatprep.subr.mxu0 0.0
  %899 = vmatpush1.msra.mxu0 0.0
  %900 = vmatprep.subr.mxu0 0.0
  %901 = vmatpush1.msra.mxu0 0.0
  %902 = vmatprep.subr.mxu0 0.0
  %903 = vmatpush1.msra.mxu0 0.0
  %904 = vmatprep.subr.mxu0 0.0
  %905 = vmatpush1.msra.mxu0 0.0
  %906 = vmatprep.mubr.f32.mxu0 0.0
  %907 = vmatmul.mubr.f32.gmra.mrb[0].mxu0 %v761
  %v908 = vpop.f32.mrb[0].mxu0
  %v909 = vadd.f32 %v841, %v908
  %v910 = vpop.f32.mrb[0].mxu0
  %911 = vdwg.mxu0
  %s912 = scalar_lea.vmem %s7, 64
  %v913 = vld [vmem:[%s912] sm:$0xff]
  %v914 = vld [vmem:[%s912 + $0x8] sm:$0xff]
  %v915 = vld [vmem:[%s912 + $0x10] sm:$0xff]
  %v916 = vld [vmem:[%s912 + $0x18] sm:$0xff]
  %v917 = vlaneseq
  %v918 = vshrl.u32 %v917, 7
  %v919 = vsub.s32 0, %v918
  %v920 = vrot.slane %v48, %v919
  %921 = vmatprep.subr.mxu0 0.0
  %922 = vmatpush1.msra.mxu0 %v913
  %923 = vmatprep.subr.mxu0 0.0
  %924 = vmatpush1.msra.mxu0 %v914
  %925 = vmatprep.subr.mxu0 0.0
  %926 = vmatpush1.msra.mxu0 %v915
  %927 = vmatprep.subr.mxu0 0.0
  %928 = vmatpush1.msra.mxu0 %v916
  %929 = vmatprep.subr.mxu0 0.0
  %930 = vmatpush1.msra.mxu0 0.0
  %931 = vmatprep.subr.mxu0 0.0
  %932 = vmatpush1.msra.mxu0 0.0
  %933 = vmatprep.subr.mxu0 0.0
  %934 = vmatpush1.msra.mxu0 0.0
  %935 = vmatprep.subr.mxu0 0.0
  %936 = vmatpush1.msra.mxu0 0.0
  %937 = vmatprep.subr.mxu0 0.0
  %938 = vmatpush1.msra.mxu0 0.0
  %939 = vmatprep.subr.mxu0 0.0
  %940 = vmatpush1.msra.mxu0 0.0
  %941 = vmatprep.subr.mxu0 0.0
  %942 = vmatpush1.msra.mxu0 0.0
  %943 = vmatprep.subr.mxu0 0.0
  %944 = vmatpush1.msra.mxu0 0.0
  %945 = vmatprep.subr.mxu0 0.0
  %946 = vmatpush1.msra.mxu0 0.0
  %947 = vmatprep.subr.mxu0 0.0
  %948 = vmatpush1.msra.mxu0 0.0
  %949 = vmatprep.subr.mxu0 0.0
  %950 = vmatpush1.msra.mxu0 0.0
  %951 = vmatprep.subr.mxu0 0.0
  %952 = vmatpush1.msra.mxu0 0.0
  %953 = vmatprep.subr.mxu0 0.0
  %954 = vmatpush1.msra.mxu0 0.0
  %955 = vmatprep.subr.mxu0 0.0
  %956 = vmatpush1.msra.mxu0 0.0
  %957 = vmatprep.subr.mxu0 0.0
  %958 = vmatpush1.msra.mxu0 0.0
  %959 = vmatprep.subr.mxu0 0.0
  %960 = vmatpush1.msra.mxu0 0.0
  %961 = vmatprep.subr.mxu0 0.0
  %962 = vmatpush1.msra.mxu0 0.0
  %963 = vmatprep.subr.mxu0 0.0
  %964 = vmatpush1.msra.mxu0 0.0
  %965 = vmatprep.subr.mxu0 0.0
  %966 = vmatpush1.msra.mxu0 0.0
  %967 = vmatprep.subr.mxu0 0.0
  %968 = vmatpush1.msra.mxu0 0.0
  %969 = vmatprep.subr.mxu0 0.0
  %970 = vmatpush1.msra.mxu0 0.0
  %971 = vmatprep.subr.mxu0 0.0
  %972 = vmatpush1.msra.mxu0 0.0
  %973 = vmatprep.subr.mxu0 0.0
  %974 = vmatpush1.msra.mxu0 0.0
  %975 = vmatprep.subr.mxu0 0.0
  %976 = vmatpush1.msra.mxu0 0.0
  %977 = vmatprep.subr.mxu0 0.0
  %978 = vmatpush1.msra.mxu0 0.0
  %979 = vmatprep.subr.mxu0 0.0
  %980 = vmatpush1.msra.mxu0 0.0
  %981 = vmatprep.subr.mxu0 0.0
  %982 = vmatpush1.msra.mxu0 0.0
  %983 = vmatprep.subr.mxu0 0.0
  %984 = vmatpush1.msra.mxu0 0.0
  %985 = vmatprep.mubr.f32.mxu0 0.0
  %986 = vmatmul.mubr.f32.gmra.mrb[0].mxu0 %v761
  %v987 = vpop.f32.mrb[0].mxu0
  %v988 = vadd.f32 %v920, %v987
  %v989 = vpop.f32.mrb[0].mxu0
  %990 = vdwg.mxu0
  %v991 = vld [vmem:[%s8] sm:$0xff]
  %v992 = vld [vmem:[%s8 + $0x8] sm:$0xff]
  %v993 = vld [vmem:[%s8 + $0x10] sm:$0xff]
  %v994 = vld [vmem:[%s8 + $0x18] sm:$0xff]
  %v995 = vlaneseq
  %v996 = vshrl.u32 %v995, 7
  %v997 = vsub.s32 0, %v996
  %v998 = vrot.slane %v49, %v997
  %999 = vmatprep.subr.mxu0 0.0
  %1000 = vmatpush1.msra.mxu0 %v991
  %1001 = vmatprep.subr.mxu0 0.0
  %1002 = vmatpush1.msra.mxu0 %v992
  %1003 = vmatprep.subr.mxu0 0.0
  %1004 = vmatpush1.msra.mxu0 %v993
  %1005 = vmatprep.subr.mxu0 0.0
  %1006 = vmatpush1.msra.mxu0 %v994
  %1007 = vmatprep.subr.mxu0 0.0
  %1008 = vmatpush1.msra.mxu0 0.0
  %1009 = vmatprep.subr.mxu0 0.0
  %1010 = vmatpush1.msra.mxu0 0.0
  %1011 = vmatprep.subr.mxu0 0.0
  %1012 = vmatpush1.msra.mxu0 0.0
  %1013 = vmatprep.subr.mxu0 0.0
  %1014 = vmatpush1.msra.mxu0 0.0
  %1015 = vmatprep.subr.mxu0 0.0
  %1016 = vmatpush1.msra.mxu0 0.0
  %1017 = vmatprep.subr.mxu0 0.0
  %1018 = vmatpush1.msra.mxu0 0.0
  %1019 = vmatprep.subr.mxu0 0.0
  %1020 = vmatpush1.msra.mxu0 0.0
  %1021 = vmatprep.subr.mxu0 0.0
  %1022 = vmatpush1.msra.mxu0 0.0
  %1023 = vmatprep.subr.mxu0 0.0
  %1024 = vmatpush1.msra.mxu0 0.0
  %1025 = vmatprep.subr.mxu0 0.0
  %1026 = vmatpush1.msra.mxu0 0.0
  %1027 = vmatprep.subr.mxu0 0.0
  %1028 = vmatpush1.msra.mxu0 0.0
  %1029 = vmatprep.subr.mxu0 0.0
  %1030 = vmatpush1.msra.mxu0 0.0
  %1031 = vmatprep.subr.mxu0 0.0
  %1032 = vmatpush1.msra.mxu0 0.0
  %1033 = vmatprep.subr.mxu0 0.0
  %1034 = vmatpush1.msra.mxu0 0.0
  %1035 = vmatprep.subr.mxu0 0.0
  %1036 = vmatpush1.msra.mxu0 0.0
  %1037 = vmatprep.subr.mxu0 0.0
  %1038 = vmatpush1.msra.mxu0 0.0
  %1039 = vmatprep.subr.mxu0 0.0
  %1040 = vmatpush1.msra.mxu0 0.0
  %1041 = vmatprep.subr.mxu0 0.0
  %1042 = vmatpush1.msra.mxu0 0.0
  %1043 = vmatprep.subr.mxu0 0.0
  %1044 = vmatpush1.msra.mxu0 0.0
  %1045 = vmatprep.subr.mxu0 0.0
  %1046 = vmatpush1.msra.mxu0 0.0
  %1047 = vmatprep.subr.mxu0 0.0
  %1048 = vmatpush1.msra.mxu0 0.0
  %1049 = vmatprep.subr.mxu0 0.0
  %1050 = vmatpush1.msra.mxu0 0.0
  %1051 = vmatprep.subr.mxu0 0.0
  %1052 = vmatpush1.msra.mxu0 0.0
  %1053 = vmatprep.subr.mxu0 0.0
  %1054 = vmatpush1.msra.mxu0 0.0
  %1055 = vmatprep.subr.mxu0 0.0
  %1056 = vmatpush1.msra.mxu0 0.0
  %1057 = vmatprep.subr.mxu0 0.0
  %1058 = vmatpush1.msra.mxu0 0.0
  %1059 = vmatprep.subr.mxu0 0.0
  %1060 = vmatpush1.msra.mxu0 0.0
  %1061 = vmatprep.subr.mxu0 0.0
  %1062 = vmatpush1.msra.mxu0 0.0
  %1063 = vmatprep.mubr.f32.mxu0 0.0
  %1064 = vmatmul.mubr.f32.gmra.mrb[0].mxu0 %v62
  %v1065 = vpop.f32.mrb[0].mxu0
  %v1066 = vadd.f32 %v998, %v1065
  %v1067 = vpop.f32.mrb[0].mxu0
  %1068 = vdwg.mxu0
  %s1069 = scalar_lea.vmem %s8, 32
  %v1070 = vld [vmem:[%s1069] sm:$0xff]
  %v1071 = vld [vmem:[%s1069 + $0x8] sm:$0xff]
  %v1072 = vld [vmem:[%s1069 + $0x10] sm:$0xff]
  %v1073 = vld [vmem:[%s1069 + $0x18] sm:$0xff]
  %v1074 = vlaneseq
  %v1075 = vshrl.u32 %v1074, 7
  %v1076 = vsub.s32 0, %v1075
  %v1077 = vrot.slane %v50, %v1076
  %1078 = vmatprep.subr.mxu0 0.0
  %1079 = vmatpush1.msra.mxu0 %v1070
  %1080 = vmatprep.subr.mxu0 0.0
  %1081 = vmatpush1.msra.mxu0 %v1071
  %1082 = vmatprep.subr.mxu0 0.0
  %1083 = vmatpush1.msra.mxu0 %v1072
  %1084 = vmatprep.subr.mxu0 0.0
  %1085 = vmatpush1.msra.mxu0 %v1073
  %1086 = vmatprep.subr.mxu0 0.0
  %1087 = vmatpush1.msra.mxu0 0.0
  %1088 = vmatprep.subr.mxu0 0.0
  %1089 = vmatpush1.msra.mxu0 0.0
  %1090 = vmatprep.subr.mxu0 0.0
  %1091 = vmatpush1.msra.mxu0 0.0
  %1092 = vmatprep.subr.mxu0 0.0
  %1093 = vmatpush1.msra.mxu0 0.0
  %1094 = vmatprep.subr.mxu0 0.0
  %1095 = vmatpush1.msra.mxu0 0.0
  %1096 = vmatprep.subr.mxu0 0.0
  %1097 = vmatpush1.msra.mxu0 0.0
  %1098 = vmatprep.subr.mxu0 0.0
  %1099 = vmatpush1.msra.mxu0 0.0
  %1100 = vmatprep.subr.mxu0 0.0
  %1101 = vmatpush1.msra.mxu0 0.0
  %1102 = vmatprep.subr.mxu0 0.0
  %1103 = vmatpush1.msra.mxu0 0.0
  %1104 = vmatprep.subr.mxu0 0.0
  %1105 = vmatpush1.msra.mxu0 0.0
  %1106 = vmatprep.subr.mxu0 0.0
  %1107 = vmatpush1.msra.mxu0 0.0
  %1108 = vmatprep.subr.mxu0 0.0
  %1109 = vmatpush1.msra.mxu0 0.0
  %1110 = vmatprep.subr.mxu0 0.0
  %1111 = vmatpush1.msra.mxu0 0.0
  %1112 = vmatprep.subr.mxu0 0.0
  %1113 = vmatpush1.msra.mxu0 0.0
  %1114 = vmatprep.subr.mxu0 0.0
  %1115 = vmatpush1.msra.mxu0 0.0
  %1116 = vmatprep.subr.mxu0 0.0
  %1117 = vmatpush1.msra.mxu0 0.0
  %1118 = vmatprep.subr.mxu0 0.0
  %1119 = vmatpush1.msra.mxu0 0.0
  %1120 = vmatprep.subr.mxu0 0.0
  %1121 = vmatpush1.msra.mxu0 0.0
  %1122 = vmatprep.subr.mxu0 0.0
  %1123 = vmatpush1.msra.mxu0 0.0
  %1124 = vmatprep.subr.mxu0 0.0
  %1125 = vmatpush1.msra.mxu0 0.0
  %1126 = vmatprep.subr.mxu0 0.0
  %1127 = vmatpush1.msra.mxu0 0.0
  %1128 = vmatprep.subr.mxu0 0.0
  %1129 = vmatpush1.msra.mxu0 0.0
  %1130 = vmatprep.subr.mxu0 0.0
  %1131 = vmatpush1.msra.mxu0 0.0
  %1132 = vmatprep.subr.mxu0 0.0
  %1133 = vmatpush1.msra.mxu0 0.0
  %1134 = vmatprep.subr.mxu0 0.0
  %1135 = vmatpush1.msra.mxu0 0.0
  %1136 = vmatprep.subr.mxu0 0.0
  %1137 = vmatpush1.msra.mxu0 0.0
  %1138 = vmatprep.subr.mxu0 0.0
  %1139 = vmatpush1.msra.mxu0 0.0
  %1140 = vmatprep.subr.mxu0 0.0
  %1141 = vmatpush1.msra.mxu0 0.0
  %1142 = vmatprep.mubr.f32.mxu0 0.0
  %1143 = vmatmul.mubr.f32.gmra.mrb[0].mxu0 %v62
  %v1144 = vpop.f32.mrb[0].mxu0
  %v1145 = vadd.f32 %v1077, %v1144
  %v1146 = vpop.f32.mrb[0].mxu0
  %1147 = vdwg.mxu0
  %s1148 = scalar_lea.vmem %s8, 64
  %v1149 = vld [vmem:[%s1148] sm:$0xff]
  %v1150 = vld [vmem:[%s1148 + $0x8] sm:$0xff]
  %v1151 = vld [vmem:[%s1148 + $0x10] sm:$0xff]
  %v1152 = vld [vmem:[%s1148 + $0x18] sm:$0xff]
  %v1153 = vlaneseq
  %v1154 = vshrl.u32 %v1153, 7
  %v1155 = vsub.s32 0, %v1154
  %v1156 = vrot.slane %v51, %v1155
  %1157 = vmatprep.subr.mxu0 0.0
  %1158 = vmatpush1.msra.mxu0 %v1149
  %1159 = vmatprep.subr.mxu0 0.0
  %1160 = vmatpush1.msra.mxu0 %v1150
  %1161 = vmatprep.subr.mxu0 0.0
  %1162 = vmatpush1.msra.mxu0 %v1151
  %1163 = vmatprep.subr.mxu0 0.0
  %1164 = vmatpush1.msra.mxu0 %v1152
  %1165 = vmatprep.subr.mxu0 0.0
  %1166 = vmatpush1.msra.mxu0 0.0
  %1167 = vmatprep.subr.mxu0 0.0
  %1168 = vmatpush1.msra.mxu0 0.0
  %1169 = vmatprep.subr.mxu0 0.0
  %1170 = vmatpush1.msra.mxu0 0.0
  %1171 = vmatprep.subr.mxu0 0.0
  %1172 = vmatpush1.msra.mxu0 0.0
  %1173 = vmatprep.subr.mxu0 0.0
  %1174 = vmatpush1.msra.mxu0 0.0
  %1175 = vmatprep.subr.mxu0 0.0
  %1176 = vmatpush1.msra.mxu0 0.0
  %1177 = vmatprep.subr.mxu0 0.0
  %1178 = vmatpush1.msra.mxu0 0.0
  %1179 = vmatprep.subr.mxu0 0.0
  %1180 = vmatpush1.msra.mxu0 0.0
  %1181 = vmatprep.subr.mxu0 0.0
  %1182 = vmatpush1.msra.mxu0 0.0
  %1183 = vmatprep.subr.mxu0 0.0
  %1184 = vmatpush1.msra.mxu0 0.0
  %1185 = vmatprep.subr.mxu0 0.0
  %1186 = vmatpush1.msra.mxu0 0.0
  %1187 = vmatprep.subr.mxu0 0.0
  %1188 = vmatpush1.msra.mxu0 0.0
  %1189 = vmatprep.subr.mxu0 0.0
  %1190 = vmatpush1.msra.mxu0 0.0
  %1191 = vmatprep.subr.mxu0 0.0
  %1192 = vmatpush1.msra.mxu0 0.0
  %1193 = vmatprep.subr.mxu0 0.0
  %1194 = vmatpush1.msra.mxu0 0.0
  %1195 = vmatprep.subr.mxu0 0.0
  %1196 = vmatpush1.msra.mxu0 0.0
  %1197 = vmatprep.subr.mxu0 0.0
  %1198 = vmatpush1.msra.mxu0 0.0
  %1199 = vmatprep.subr.mxu0 0.0
  %1200 = vmatpush1.msra.mxu0 0.0
  %1201 = vmatprep.subr.mxu0 0.0
  %1202 = vmatpush1.msra.mxu0 0.0
  %1203 = vmatprep.subr.mxu0 0.0
  %1204 = vmatpush1.msra.mxu0 0.0
  %1205 = vmatprep.subr.mxu0 0.0
  %1206 = vmatpush1.msra.mxu0 0.0
  %1207 = vmatprep.subr.mxu0 0.0
  %1208 = vmatpush1.msra.mxu0 0.0
  %1209 = vmatprep.subr.mxu0 0.0
  %1210 = vmatpush1.msra.mxu0 0.0
  %1211 = vmatprep.subr.mxu0 0.0
  %1212 = vmatpush1.msra.mxu0 0.0
  %1213 = vmatprep.subr.mxu0 0.0
  %1214 = vmatpush1.msra.mxu0 0.0
  %1215 = vmatprep.subr.mxu0 0.0
  %1216 = vmatpush1.msra.mxu0 0.0
  %1217 = vmatprep.subr.mxu0 0.0
  %1218 = vmatpush1.msra.mxu0 0.0
  %1219 = vmatprep.subr.mxu0 0.0
  %1220 = vmatpush1.msra.mxu0 0.0
  %1221 = vmatprep.mubr.f32.mxu0 0.0
  %1222 = vmatmul.mubr.f32.gmra.mrb[0].mxu0 %v62
  %v1223 = vpop.f32.mrb[0].mxu0
  %v1224 = vadd.f32 %v1156, %v1223
  %v1225 = vpop.f32.mrb[0].mxu0
  %1226 = vdwg.mxu0
  %v1227 = vadd.f32 %v830, %v1066
  %v1228 = vxor.u32 %v1227, 2147483648
  %v1229 = vmul.f32 %v1228, 1.442695
  %v1230 = vpow.pop %v1229
  %v1231 = vadd.f32 %v1230, 1.0
  %v1232 = vrcp.pop %v1231
  %v1233 = vmul.f32 1.0, %v1232
  %v1234 = vadd.f32 %v909, %v1145
  %v1235 = vxor.u32 %v1234, 2147483648
  %v1236 = vmul.f32 %v1235, 1.442695
  %v1237 = vpow.pop %v1236
  %v1238 = vadd.f32 %v1237, 1.0
  %v1239 = vrcp.pop %v1238
  %v1240 = vmul.f32 1.0, %v1239
  %v1241 = vmul.f32 %v1233, %v1224
  %v1242 = vadd.f32 %v988, %v1241
  %v1243 = vtanh.pop %v1242
  %v1244 = vsub.f32 1.0, %v1240
  %v1245 = vmul.f32 %v1244, %v1243
  %v1246 = vmul.f32 %v1240, %v42
  %v1247 = vadd.f32 %v1245, %v1246
  %1248 = vst.msk [vmem:[%s12] sm:$0xff] %vm60, %v1247
  %v1249 = vld [vmem:[%s9] sm:$0xff]
  %v1250 = vld [vmem:[%s9 + $0x8] sm:$0xff]
  %v1251 = vld [vmem:[%s9 + $0x10] sm:$0xff]
  %v1252 = vld [vmem:[%s9 + $0x18] sm:$0xff]
  %v1253 = vlaneseq
  %v1254 = vshrl.u32 %v1253, 7
  %v1255 = vsub.s32 0, %v1254
  %v1256 = vrot.slane %v45, %v1255
  %v1258 = vsel %vm60, %v1247, 0
  %1260 = vmatprep.subr.mxu0 0.0
  %1261 = vmatpush1.msra.mxu0 %v1249
  %1262 = vmatprep.subr.mxu0 0.0
  %1263 = vmatpush1.msra.mxu0 %v1250
  %1264 = vmatprep.subr.mxu0 0.0
  %1265 = vmatpush1.msra.mxu0 %v1251
  %1266 = vmatprep.subr.mxu0 0.0
  %1267 = vmatpush1.msra.mxu0 %v1252
  %1268 = vmatprep.subr.mxu0 0.0
  %1269 = vmatpush1.msra.mxu0 0.0
  %1270 = vmatprep.subr.mxu0 0.0
  %1271 = vmatpush1.msra.mxu0 0.0
  %1272 = vmatprep.subr.mxu0 0.0
  %1273 = vmatpush1.msra.mxu0 0.0
  %1274 = vmatprep.subr.mxu0 0.0
  %1275 = vmatpush1.msra.mxu0 0.0
  %1276 = vmatprep.subr.mxu0 0.0
  %1277 = vmatpush1.msra.mxu0 0.0
  %1278 = vmatprep.subr.mxu0 0.0
  %1279 = vmatpush1.msra.mxu0 0.0
  %1280 = vmatprep.subr.mxu0 0.0
  %1281 = vmatpush1.msra.mxu0 0.0
  %1282 = vmatprep.subr.mxu0 0.0
  %1283 = vmatpush1.msra.mxu0 0.0
  %1284 = vmatprep.subr.mxu0 0.0
  %1285 = vmatpush1.msra.mxu0 0.0
  %1286 = vmatprep.subr.mxu0 0.0
  %1287 = vmatpush1.msra.mxu0 0.0
  %1288 = vmatprep.subr.mxu0 0.0
  %1289 = vmatpush1.msra.mxu0 0.0
  %1290 = vmatprep.subr.mxu0 0.0
  %1291 = vmatpush1.msra.mxu0 0.0
  %1292 = vmatprep.subr.mxu0 0.0
  %1293 = vmatpush1.msra.mxu0 0.0
  %1294 = vmatprep.subr.mxu0 0.0
  %1295 = vmatpush1.msra.mxu0 0.0
  %1296 = vmatprep.subr.mxu0 0.0
  %1297 = vmatpush1.msra.mxu0 0.0
  %1298 = vmatprep.subr.mxu0 0.0
  %1299 = vmatpush1.msra.mxu0 0.0
  %1300 = vmatprep.subr.mxu0 0.0
  %1301 = vmatpush1.msra.mxu0 0.0
  %1302 = vmatprep.subr.mxu0 0.0
  %1303 = vmatpush1.msra.mxu0 0.0
  %1304 = vmatprep.subr.mxu0 0.0
  %1305 = vmatpush1.msra.mxu0 0.0
  %1306 = vmatprep.subr.mxu0 0.0
  %1307 = vmatpush1.msra.mxu0 0.0
  %1308 = vmatprep.subr.mxu0 0.0
  %1309 = vmatpush1.msra.mxu0 0.0
  %1310 = vmatprep.subr.mxu0 0.0
  %1311 = vmatpush1.msra.mxu0 0.0
  %1312 = vmatprep.subr.mxu0 0.0
  %1313 = vmatpush1.msra.mxu0 0.0
  %1314 = vmatprep.subr.mxu0 0.0
  %1315 = vmatpush1.msra.mxu0 0.0
  %1316 = vmatprep.subr.mxu0 0.0
  %1317 = vmatpush1.msra.mxu0 0.0
  %1318 = vmatprep.subr.mxu0 0.0
  %1319 = vmatpush1.msra.mxu0 0.0
  %1320 = vmatprep.subr.mxu0 0.0
  %1321 = vmatpush1.msra.mxu0 0.0
  %1322 = vmatprep.subr.mxu0 0.0
  %1323 = vmatpush1.msra.mxu0 0.0
  %1324 = vmatprep.mubr.f32.mxu0 0.0
  %1325 = vmatmul.mubr.f32.gmra.mrb[0].mxu0 %v1258
  %v1326 = vpop.f32.mrb[0].mxu0
  %v1327 = vadd.f32 %v1256, %v1326
  %v1328 = vpop.f32.mrb[0].mxu0
  %1329 = vdwg.mxu0
  %vm1330 = vcmask 130048
  %v1331 = vsel %vm1330, %v1327, -inf
  %1332 = vmax.xlane.f32.xlu0 %v1331
  %v1333 = vpop.xlane.xlu0 %1332
  %v1334 = vsub.f32 %v1327, %v1333
  %v1335 = vmul.f32 %v1334, 1.442695
  %v1336 = vpow.pop %v1335
  %v1337 = vsel %vm1330, %v1336, 0.0
  %1338 = vadd.xlane.f32.xlu0 %v1337
  %v1339 = vpop.xlane.xlu0 %1338
  %v1340 = vlog2.pop %v1339
  %v1341 = vmul.f32 %v1340, 0.6931472
  %v1342 = vadd.f32 %v1341, %v1333
  %v1343 = vsub.f32 %v1327, %v1342
  %1344 = vst.msk [vmem:[%s11] sm:$0xff] %vm1330, %v1343
  // Predicated region
  $region46: #{attn_decoder_forward.1} parent=0 // pred_check
    _
  $region47: #{attn_decoder_forward.1} parent=0 // pred_check_branch
    %1346 = sbr.rel (0) target = $region49
  $region48: #{attn_decoder_forward.1} parent=0 // pred_region
    _
  $region49: #{attn_decoder_forward.1} parent=0 // pred_fallthru
    _
  // Predicated region
  $region50: #{attn_decoder_forward.1} parent=0 // pred_check
    _
  $region51: #{attn_decoder_forward.1} parent=0 // pred_check_branch
    %1348 = sbr.rel (0) target = $region53
  $region52: #{attn_decoder_forward.1} parent=0 // pred_region
    _
  $region53: #{attn_decoder_forward.1} parent=0 // pred_fallthru
    _
  // Predicated region
  $region54: #{attn_decoder_forward.1} parent=0 // pred_check
    _
  $region55: #{attn_decoder_forward.1} parent=0 // pred_check_branch
    %1350 = sbr.rel (0) target = $region57
  $region56: #{attn_decoder_forward.1} parent=0 // pred_region
    _
  $region57: #{attn_decoder_forward.1} parent=0 // pred_fallthru
    _
  // Predicated region
  $region58: #{attn_decoder_forward.1} parent=0 // pred_check
    _
  $region59: #{attn_decoder_forward.1} parent=0 // pred_check_branch
    %1352 = sbr.rel (0) target = $region61
  $region60: #{attn_decoder_forward.1} parent=0 // pred_region
    _
  $region61: #{attn_decoder_forward.1} parent=0 // pred_fallthru
    _
  // Predicated region
  $region62: #{attn_decoder_forward.1} parent=0 // pred_check
    _
  $region63: #{attn_decoder_forward.1} parent=0 // pred_check_branch
    %1354 = sbr.rel (0) target = $region65
  $region64: #{attn_decoder_forward.1} parent=0 // pred_region
    _
  $region65: #{attn_decoder_forward.1} parent=0 // pred_fallthru
    _
  // Predicated region
  $region66: #{attn_decoder_forward.1} parent=0 // pred_check
    _
  $region67: #{attn_decoder_forward.1} parent=0 // pred_check_branch
    %1356 = sbr.rel (0) target = $region69
  $region68: #{attn_decoder_forward.1} parent=0 // pred_region
    _
  $region69: #{attn_decoder_forward.1} parent=0 // pred_fallthru
    _

</llo_original>
